<compile_context>
chip_gen: v7x
topology: tpu7x:2x2x1
jax: 0.10.0
libtpu: 0.0.40
codegen_flags: <defaults>
</compile_context>

<pallas_src>
import jax
import jax.numpy as jnp
import numpy as np
from jax.experimental import pallas as pl
from jax.experimental.pallas import tpu as pltpu


def _round_up(x, m):
    return ((x + m - 1) // m) * m


def _cdiv(a, b):
    return -(-a // b)


def _avgpool3_hw3(x):
    """Plain-JAX 3x3 avg pool over (H, W, C), zero pad, /9 (init-time + ref)."""
    h, w = x.shape[0], x.shape[1]
    xp = jnp.pad(x, ((1, 1), (1, 1), (0, 0)))
    acc = jnp.zeros_like(x)
    for i in range(3):
        for j in range(3):
            acc = acc + xp[i:i + h, j:j + w, :]
    return acc / 9.0


def _tpu_defaults():
    """Generation-aware VMEM limit + TensorCore count (robust fallbacks)."""
    vmem_limit = 32 * 1024 * 1024
    num_cores = 1
    try:
        kind = jax.devices()[0].device_kind.lower()
    except Exception:
        kind = ""
    if "v7" in kind:
        vmem_limit = 40 * 1024 * 1024     # 64 MiB physical per TC: headroom
        num_cores = 2
    elif "v5" in kind or "v6" in kind:
        vmem_limit = 64 * 1024 * 1024     # 128 MiB physical per core
    return vmem_limit, num_cores


# --------------------------- kernel factory ---------------------------------

def make_loss_all(mask, camera_param, rgb, l, tile_h=None):
    """Mirrors LossAll.__init__: bake mask, camera rays, rgb residual, SH coeffs."""
    H, W = mask.shape
    vmem_limit, num_cores = _tpu_defaults()

    Hr = _round_up(H, 8)
    if tile_h is None:
        if num_cores >= 2:
            # even number of tiles for 2-TC load balance, tile_h <= 128
            k = max(1, _cdiv(Hr, 2 * 128))
            tile_h = _round_up(_cdiv(Hr, 2 * k), 8)
        else:
            # single TC: one tile for small/moderate H (no per-step overhead,
            # no wasted halo compute); cap at 128 rows for big images
            tile_h = Hr if Hr <= 256 else 128
    tile_h = int(min(_round_up(int(tile_h), 8), Hr))

    n_tiles = _cdiv(H, tile_h)
    Hc = n_tiles * tile_h                # core rows, multiple of tile_h
    HALO = 8                             # 8-row halo keeps slices 8-aligned
    # dependency depth: avgpool(+-1 row) of quantities built from shift_h(+1)
    assert HALO >= 2, "halo must cover the 2-row shift/avgpool dependency"
    Hp = Hc + 2 * HALO
    WIN = tile_h + 2 * HALO

    maskf = (mask > 0).astype(jnp.float32)
    nmask = maskf.sum()                  # init-time constant (assumed > 0)

    # camera rays  p3d = K^-1 @ [x, y, 1]
    yy, xx = jnp.meshgrid(jnp.arange(H, dtype=jnp.float32),
                          jnp.arange(W, dtype=jnp.float32), indexing="ij")
    p2d = jnp.stack([xx, yy, jnp.ones_like(xx)], axis=-1)               # (H,W,3)
    kinv = jnp.linalg.inv(camera_param.astype(jnp.float32))
    p3d = jnp.einsum("ab,hwb->hwa", kinv, p2d)
    p3d_cf = jnp.transpose(p3d, (2, 0, 1)).astype(jnp.float32)          # (3,H,W)

    rgb32 = rgb.astype(jnp.float32)
    rgbres_cf = jnp.transpose(rgb32 - _avgpool3_hw3(rgb32), (2, 0, 1))  # (3,H,W)

    # zero padding reproduces the global zero-pad pooling / shift boundaries;
    # init-time constants are pre-windowed into overlapped per-tile layouts so
    # every kernel input is a per-tile block (no full-image-resident VMEM).
    mask_pad = jnp.pad(maskf, ((HALO, Hp - HALO - H), (0, 0)))
    p3d_pad = jnp.pad(p3d_cf, ((0, 0), (HALO, Hp - HALO - H), (0, 0)))
    mask_win = jnp.stack(
        [mask_pad[i * tile_h:i * tile_h + WIN, :] for i in range(n_tiles)], 0)
    p3d_win = jnp.stack(
        [p3d_pad[:, i * tile_h:i * tile_h + WIN, :] for i in range(n_tiles)], 0)
    rgbres_pad = jnp.pad(rgbres_cf, ((0, 0), (0, Hc - H), (0, 0)))      # (3,Hc,W)

    # the (9,3) SH lighting matrix is an __init__-time constant -> immediates
    Lnp = np.asarray(l, dtype=np.float32)
    L = [[float(Lnp[k, c]) for c in range(3)] for k in range(9)]

    weights = jnp.array([1.0, 20.0, 4.0], jnp.float32)
    weights = weights / weights.sum()

    # ------------------------------- kernel ---------------------------------
    def kernel(depth_ref, dinit_ref, mask_ref, p3d_ref, rgbres_ref, out_ref):
        # depth_ref/mask_ref: (WIN, W)   p3d_ref: (3, WIN, W)
        # dinit_ref: (tile_h, W)         rgbres_ref: (3, tile_h, W)
        # out_ref: (3, 8, W) lane-dense per-tile partial sums

        # cached lane-validity masks for width-direction shifts; the
        # H-direction rolls need no masks thanks to the zero-padded halo.
        lane = jax.lax.broadcasted_iota(jnp.int32, (WIN, W), 1)
        w_has_right = lane < (W - 1)
        w_has_left = lane >= 1

        def shift_w(x, off, valid):
            # result[:, j] = x[:, j+off] inside the image, 0 outside
            return jnp.where(valid, pltpu.roll(x, (-off) % W, 1), 0.0)

        def shift_h(x, off):
            # result[j, :] = x[j+off, :]; wrapped rows only reach halo rows
            # that are never consumed (HALO >= dependency depth).
            return pltpu.roll(x, (-off) % WIN, 0)

        def avgpool3(x, x_up=None):
            if x_up is None:
                x_up = shift_h(x, 1)
            rows = x + x_up + shift_h(x, -1)
            full = rows + shift_w(rows, 1, w_has_right) + shift_w(rows, -1, w_has_left)
            return full * (1.0 / 9.0)

        def fold8(x):
            # (tile_h, W) -> (8, W) partial sums: pure elementwise vreg adds,
            # no cross-lane/sublane XLU reductions in the kernel.
            acc = x[0:8, :]
            for r in range(8, tile_h, 8):
                acc = acc + x[r:r + 8, :]
            return acc

        dwin = depth_ref[...]
        mwin = mask_ref[...]
        maskc = mwin[HALO:HALO + tile_h, :]

        # back-projected points p = (K^-1 p2d) * depth, per x/y/z channel
        p = [p3d_ref[c] * dwin for c in range(3)]
        # hoisted: reused by both the normal cross-product and avgpool3(p)
        p_up = [shift_h(p[c], 1) for c in range(3)]

        # neighbour differences and surface normal n = normalize(cross(a, b))
        a = [shift_w(p[c], 1, w_has_right) - p[c] for c in range(3)]
        b = [p_up[c] - p[c] for c in range(3)]
        nx = a[1] * b[2] - a[2] * b[1]
        ny = a[2] * b[0] - a[0] * b[2]
        nz = a[0] * b[1] - a[1] * b[0]
        inv = jax.lax.rsqrt(jnp.maximum(nx * nx + ny * ny + nz * nz, 1e-24))
        nx = nx * inv
        ny = ny * inv
        nz = nz * inv
        nx2 = nx * nx
        ny2 = ny * ny
        nz2 = nz * nz

        # B = H_sh @ l, feature-outer / channel-inner, l entries as immediates,
        # constant SH term added as a scalar at the end (no ones-image mul).
        def fma(bc, feat, k):
            return [bc[c] + feat * L[k][c] for c in range(3)]

        bc = [ny * L[1][c] for c in range(3)]
        bc = fma(bc, nz, 2)
        bc = fma(bc, nx, 3)
        bc = fma(bc, nx * ny, 4)
        bc = fma(bc, ny * nz, 5)
        bc = fma(bc, 2.0 * nz2 - nx2 - ny2, 6)
        bc = fma(bc, nz * nx, 7)
        bc = fma(bc, nx2 - ny2, 8)
        bc = [bc[c] + L[0][c] for c in range(3)]

        # deferred reductions: elementwise accumulators, masked + folded once
        acc_sh = jnp.zeros((tile_h, W), jnp.float32)
        acc_sm = jnp.zeros((tile_h, W), jnp.float32)
        for c in range(3):
            render = bc[c] * mwin                       # render_img (0 off-mask)
            rmean = avgpool3(render)                    # render_mean
            r = (render[HALO:HALO + tile_h, :]
                 - rmean[HALO:HALO + tile_h, :]
                 - rgbres_ref[c])                       # minus (rgb - rgbmean)
            acc_sh = acc_sh + r * r

            pmean = avgpool3(p[c], p_up[c])             # smooth: p vs local mean
            d = p[c][HALO:HALO + tile_h, :] - pmean[HALO:HALO + tile_h, :]
            acc_sm = acc_sm + d * d

        dd = dwin[HALO:HALO + tile_h, :] - dinit_ref[...]

        # lane-dense (8, W) vreg partial sums; cross-lane reduce in the wrapper
        out_ref[0, :, :] = fold8(maskc * acc_sh)
        out_ref[1, :, :] = fold8(maskc * acc_sm)
        out_ref[2, :, :] = fold8(dd * dd)               # depth MSE, all pixels

    call = pl.pallas_call(
        kernel,
        out_shape=jax.ShapeDtypeStruct((n_tiles, 3, 8, W), jnp.float32),
        grid=(n_tiles,),
        in_specs=[
            pl.BlockSpec((None, WIN, W), lambda i: (i, 0, 0)),       # depth windows
            pl.BlockSpec((tile_h, W), lambda i: (i, 0)),             # depth_init
            pl.BlockSpec((None, WIN, W), lambda i: (i, 0, 0)),       # mask windows
            pl.BlockSpec((None, 3, WIN, W), lambda i: (i, 0, 0, 0)),  # camera rays
            pl.BlockSpec((3, tile_h, W), lambda i: (0, i, 0)),       # rgb - avg(rgb)
        ],
        out_specs=pl.BlockSpec((None, 3, 8, W), lambda i: (i, 0, 0, 0)),
        compiler_params=pltpu.CompilerParams(
            dimension_semantics=("parallel",),
            vmem_limit_bytes=vmem_limit),
    )

    @jax.jit
    def loss_all(depth, depth_init):
        depth = depth.astype(jnp.float32)
        depth_init = depth_init.astype(jnp.float32)
        depth_pad = jnp.pad(depth, ((HALO, Hp - HALO - H), (0, 0)))
        depth_win = jnp.stack(
            [jax.lax.slice_in_dim(depth_pad, i * tile_h, i * tile_h + WIN, axis=0)
             for i in range(n_tiles)], 0)
        dinit_pad = jnp.pad(depth_init, ((0, Hc - H), (0, 0)))
        parts = call(depth_win, dinit_pad, mask_win, p3d_win, rgbres_pad)
        sums = jnp.sum(parts, axis=(0, 2, 3))           # (3,)
        l_shading = sums[0] / (nmask * 3.0)             # MSE over (n_mask, 3)
        l_smooth = sums[1] / (nmask * 3.0)              # MSE over (n_mask, 3)
        l_depth = sums[2] / jnp.float32(H * W)          # MSE over full image
        return (weights[0] * l_shading + weights[1] * l_smooth
                + weights[2] * l_depth)

    return loss_all


# ----------------------------- pure-JAX reference ---------------------------

def loss_all_reference(depth, depth_init, mask, camera_param, rgb, l):
    H, W = depth.shape
    maskf = (mask > 0).astype(jnp.float32)
    yy, xx = jnp.meshgrid(jnp.arange(H, dtype=jnp.float32),
                          jnp.arange(W, dtype=jnp.float32), indexing="ij")
    p2d = jnp.stack([xx, yy, jnp.ones_like(xx)], axis=-1)
    p3d = jnp.einsum("ab,hwb->hwa", jnp.linalg.inv(camera_param), p2d)
    p = p3d * depth[..., None]
    pl_ = jnp.pad(p[:, 1:, :], ((0, 0), (0, 1), (0, 0)))
    pu_ = jnp.pad(p[1:, :, :], ((0, 1), (0, 0), (0, 0)))
    n = jnp.cross(pl_ - p, pu_ - p)
    n = n / jnp.maximum(jnp.linalg.norm(n, axis=-1, keepdims=True), 1e-12)
    nx, ny, nz = n[..., 0], n[..., 1], n[..., 2]
    hf = jnp.stack([jnp.ones_like(nx), ny, nz, nx, nx * ny, ny * nz,
                    -nx * nx - ny * ny + 2.0 * nz * nz, nz * nx,
                    nx * nx - ny * ny], axis=-1)
    bimg = jnp.einsum("hwk,kc->hwc", hf, l)
    render = bimg * maskf[..., None]
    r = (render - _avgpool3_hw3(render)) - (rgb - _avgpool3_hw3(rgb))
    nmask = maskf.sum()
    l_sh = jnp.sum(maskf[..., None] * r * r) / (nmask * 3.0)
    ds = p - _avgpool3_hw3(p)
    l_sm = jnp.sum(maskf[..., None] * ds * ds) / (nmask * 3.0)
    l_d = jnp.mean((depth - depth_init) ** 2)
    w = jnp.array([1.0, 20.0, 4.0])
    w = w / w.sum()
    return w[0] * l_sh + w[1] * l_sm + w[2] * l_d


# ----------------------------------- main -----------------------------------

if __name__ == "__main__":
    key = jax.random.PRNGKey(0)
    H, W = 32, 128
    k1, k2, k3, k4, k5 = jax.random.split(key, 5)

    depth = 1.0 + 0.1 * jax.random.normal(k1, (H, W), jnp.float32)
    depth_init = depth + 0.01 * jax.random.normal(k2, (H, W), jnp.float32)
    rgb = jax.random.uniform(k3, (H, W, 3), jnp.float32)
    mask = (jax.random.uniform(k4, (H, W)) > 0.3).astype(jnp.float32)
    l = jax.random.normal(k5, (9, 3), jnp.float32)
    camera_param = jnp.array([[100.0, 0.0, W / 2.0],
                              [0.0, 100.0, H / 2.0],
                              [0.0, 0.0, 1.0]], jnp.float32)

    ref = loss_all_reference(depth, depth_init, mask, camera_param, rgb, l)

    # tile_h=16 -> 2 H-tiles so the halo/seam path is exercised at small shapes
    loss_fn = make_loss_all(mask, camera_param, rgb, l, tile_h=16)
    loss = jax.block_until_ready(loss_fn(depth, depth_init))
    np.testing.assert_allclose(np.asarray(loss), np.asarray(ref),
                               rtol=1e-3, atol=1e-5)

    # auto (generation-aware) tile selection path
    loss_fn_auto = make_loss_all(mask, camera_param, rgb, l)
    loss_auto = jax.block_until_ready(loss_fn_auto(depth, depth_init))
    np.testing.assert_allclose(np.asarray(loss_auto), np.asarray(ref),
                               rtol=1e-3, atol=1e-5)

    print("KERNEL_OK")
</pallas_src>

<mosaic_0001>
module attributes {stable_mosaic.version = 11 : i64} {
  func.func @kernel(%arg0: i32, %arg1: memref<1x32x128xf32, #tpu.memory_space<vmem>>, %arg2: memref<16x128xf32, #tpu.memory_space<vmem>>, %arg3: memref<1x32x128xf32, #tpu.memory_space<vmem>>, %arg4: memref<1x3x32x128xf32, #tpu.memory_space<vmem>>, %arg5: memref<3x16x128xf32, #tpu.memory_space<vmem>>, %arg6: memref<1x3x8x128xf32, #tpu.memory_space<vmem>>) attributes {dimension_semantics = [#tpu.dimension_semantics<parallel>], iteration_bounds = array<i64: 2>, scalar_prefetch = 0 : i64, scratch_operands = 0 : i64, tpu.core_type = #tpu.core_type<tc>, window_params = [{transform_indices = @transform_0, window_bounds = array<i64: 1, 32, 128>}, {transform_indices = @transform_1, window_bounds = array<i64: 16, 128>}, {transform_indices = @transform_2, window_bounds = array<i64: 1, 32, 128>}, {transform_indices = @transform_3, window_bounds = array<i64: 1, 3, 32, 128>}, {transform_indices = @transform_4, window_bounds = array<i64: 3, 16, 128>}, {transform_indices = @transform_5, window_bounds = array<i64: 1, 3, 8, 128>}]} {
    %0 = tpu.iota {dimensions = array<i32: 1>} : vector<32x128xi32>
    %c127_i32 = arith.constant 127 : i32
    %1 = vector.broadcast %c127_i32 : i32 to vector<32x128xi32>
    %2 = arith.cmpi slt, %0, %1 : vector<32x128xi32>
    %c1_i32 = arith.constant 1 : i32
    %3 = vector.broadcast %c1_i32 : i32 to vector<32x128xi32>
    %4 = arith.cmpi sge, %0, %3 : vector<32x128xi32>
    %c0 = arith.constant 0 : index
    %c0_0 = arith.constant 0 : index
    %c0_1 = arith.constant 0 : index
    %5 = vector.load %arg1[%c0, %c0_0, %c0_1] : memref<1x32x128xf32, #tpu.memory_space<vmem>>, vector<1x32x128xf32>
    %6 = vector.shape_cast %5 : vector<1x32x128xf32> to vector<32x128xf32>
    %c0_2 = arith.constant 0 : index
    %c0_3 = arith.constant 0 : index
    %c0_4 = arith.constant 0 : index
    %7 = vector.load %arg3[%c0_2, %c0_3, %c0_4] : memref<1x32x128xf32, #tpu.memory_space<vmem>>, vector<1x32x128xf32>
    %8 = vector.shape_cast %7 : vector<1x32x128xf32> to vector<32x128xf32>
    %9 = vector.extract_strided_slice %8 {offsets = [8, 0], sizes = [16, 128], strides = [1, 1]} : vector<32x128xf32> to vector<16x128xf32>
    %c0_5 = arith.constant 0 : index
    %c0_6 = arith.constant 0 : index
    %c0_7 = arith.constant 0 : index
    %c0_8 = arith.constant 0 : index
    %10 = vector.load %arg4[%c0_5, %c0_6, %c0_7, %c0_8] : memref<1x3x32x128xf32, #tpu.memory_space<vmem>>, vector<1x1x32x128xf32>
    %11 = vector.shape_cast %10 : vector<1x1x32x128xf32> to vector<32x128xf32>
    %12 = arith.mulf %11, %6 : vector<32x128xf32>
    %c0_9 = arith.constant 0 : index
    %c1 = arith.constant 1 : index
    %c0_10 = arith.constant 0 : index
    %c0_11 = arith.constant 0 : index
    %13 = vector.load %arg4[%c0_9, %c1, %c0_10, %c0_11] : memref<1x3x32x128xf32, #tpu.memory_space<vmem>>, vector<1x1x32x128xf32>
    %14 = vector.shape_cast %13 : vector<1x1x32x128xf32> to vector<32x128xf32>
    %15 = arith.mulf %14, %6 : vector<32x128xf32>
    %c0_12 = arith.constant 0 : index
    %c2 = arith.constant 2 : index
    %c0_13 = arith.constant 0 : index
    %c0_14 = arith.constant 0 : index
    %16 = vector.load %arg4[%c0_12, %c2, %c0_13, %c0_14] : memref<1x3x32x128xf32, #tpu.memory_space<vmem>>, vector<1x1x32x128xf32>
    %17 = vector.shape_cast %16 : vector<1x1x32x128xf32> to vector<32x128xf32>
    %18 = arith.mulf %17, %6 : vector<32x128xf32>
    %c31_i32 = arith.constant 31 : i32
    %19 = tpu.dynamic_rotate %12 by %c31_i32 dim 0 : vector<32x128xf32>, i32 -> vector<32x128xf32>
    %c31_i32_15 = arith.constant 31 : i32
    %20 = tpu.dynamic_rotate %15 by %c31_i32_15 dim 0 : vector<32x128xf32>, i32 -> vector<32x128xf32>
    %c31_i32_16 = arith.constant 31 : i32
    %21 = tpu.dynamic_rotate %18 by %c31_i32_16 dim 0 : vector<32x128xf32>, i32 -> vector<32x128xf32>
    %c127_i32_17 = arith.constant 127 : i32
    %22 = tpu.dynamic_rotate %12 by %c127_i32_17 dim 1 : vector<32x128xf32>, i32 -> vector<32x128xf32>
    %cst = arith.constant 0.000000e+00 : f32
    %23 = vector.broadcast %cst : f32 to vector<32x128xf32>
    %24 = arith.select %2, %22, %23 : vector<32x128xi1>, vector<32x128xf32>
    %25 = arith.subf %24, %12 : vector<32x128xf32>
    %c127_i32_18 = arith.constant 127 : i32
    %26 = tpu.dynamic_rotate %15 by %c127_i32_18 dim 1 : vector<32x128xf32>, i32 -> vector<32x128xf32>
    %cst_19 = arith.constant 0.000000e+00 : f32
    %27 = vector.broadcast %cst_19 : f32 to vector<32x128xf32>
    %28 = arith.select %2, %26, %27 : vector<32x128xi1>, vector<32x128xf32>
    %29 = arith.subf %28, %15 : vector<32x128xf32>
    %c127_i32_20 = arith.constant 127 : i32
    %30 = tpu.dynamic_rotate %18 by %c127_i32_20 dim 1 : vector<32x128xf32>, i32 -> vector<32x128xf32>
    %cst_21 = arith.constant 0.000000e+00 : f32
    %31 = vector.broadcast %cst_21 : f32 to vector<32x128xf32>
    %32 = arith.select %2, %30, %31 : vector<32x128xi1>, vector<32x128xf32>
    %33 = arith.subf %32, %18 : vector<32x128xf32>
    %34 = arith.subf %19, %12 : vector<32x128xf32>
    %35 = arith.subf %20, %15 : vector<32x128xf32>
    %36 = arith.subf %21, %18 : vector<32x128xf32>
    %37 = arith.mulf %29, %36 : vector<32x128xf32>
    %38 = arith.mulf %33, %35 : vector<32x128xf32>
    %39 = arith.subf %37, %38 : vector<32x128xf32>
    %40 = arith.mulf %33, %34 : vector<32x128xf32>
    %41 = arith.mulf %25, %36 : vector<32x128xf32>
    %42 = arith.subf %40, %41 : vector<32x128xf32>
    %43 = arith.mulf %25, %35 : vector<32x128xf32>
    %44 = arith.mulf %29, %34 : vector<32x128xf32>
    %45 = arith.subf %43, %44 : vector<32x128xf32>
    %46 = arith.mulf %39, %39 : vector<32x128xf32>
    %47 = arith.mulf %42, %42 : vector<32x128xf32>
    %48 = arith.addf %46, %47 : vector<32x128xf32>
    %49 = arith.mulf %45, %45 : vector<32x128xf32>
    %50 = arith.addf %48, %49 : vector<32x128xf32>
    %cst_22 = arith.constant 1.000000e-24 : f32
    %51 = vector.broadcast %cst_22 : f32 to vector<32x128xf32>
    %52 = arith.maximumf %50, %51 : vector<32x128xf32>
    %53 = math.rsqrt %52 : vector<32x128xf32>
    %54 = arith.mulf %39, %53 : vector<32x128xf32>
    %55 = arith.mulf %42, %53 : vector<32x128xf32>
    %56 = arith.mulf %45, %53 : vector<32x128xf32>
    %57 = arith.mulf %54, %54 : vector<32x128xf32>
    %58 = arith.mulf %55, %55 : vector<32x128xf32>
    %59 = arith.mulf %56, %56 : vector<32x128xf32>
    %cst_23 = arith.constant -0.121447206 : f32
    %60 = vector.broadcast %cst_23 : f32 to vector<32x128xf32>
    %61 = arith.mulf %55, %60 : vector<32x128xf32>
    %cst_24 = arith.constant -1.34854805 : f32
    %62 = vector.broadcast %cst_24 : f32 to vector<32x128xf32>
    %63 = arith.mulf %55, %62 : vector<32x128xf32>
    %cst_25 = arith.constant -0.693677664 : f32
    %64 = vector.broadcast %cst_25 : f32 to vector<32x128xf32>
    %65 = arith.mulf %55, %64 : vector<32x128xf32>
    %cst_26 = arith.constant 0.79971975 : f32
    %66 = vector.broadcast %cst_26 : f32 to vector<32x128xf32>
    %67 = arith.mulf %56, %66 : vector<32x128xf32>
    %68 = arith.addf %61, %67 : vector<32x128xf32>
    %cst_27 = arith.constant 1.69821584 : f32
    %69 = vector.broadcast %cst_27 : f32 to vector<32x128xf32>
    %70 = arith.mulf %56, %69 : vector<32x128xf32>
    %71 = arith.addf %63, %70 : vector<32x128xf32>
    %cst_28 = arith.constant 0.420725763 : f32
    %72 = vector.broadcast %cst_28 : f32 to vector<32x128xf32>
    %73 = arith.mulf %56, %72 : vector<32x128xf32>
    %74 = arith.addf %65, %73 : vector<32x128xf32>
    %cst_29 = arith.constant -0.267408907 : f32
    %75 = vector.broadcast %cst_29 : f32 to vector<32x128xf32>
    %76 = arith.mulf %54, %75 : vector<32x128xf32>
    %77 = arith.addf %68, %76 : vector<32x128xf32>
    %cst_30 = arith.constant -0.689474702 : f32
    %78 = vector.broadcast %cst_30 : f32 to vector<32x128xf32>
    %79 = arith.mulf %54, %78 : vector<32x128xf32>
    %80 = arith.addf %71, %79 : vector<32x128xf32>
    %cst_31 = arith.constant -1.38315547 : f32
    %81 = vector.broadcast %cst_31 : f32 to vector<32x128xf32>
    %82 = arith.mulf %54, %81 : vector<32x128xf32>
    %83 = arith.addf %74, %82 : vector<32x128xf32>
    %84 = arith.mulf %54, %55 : vector<32x128xf32>
    %cst_32 = arith.constant 0.742861092 : f32
    %85 = vector.broadcast %cst_32 : f32 to vector<32x128xf32>
    %86 = arith.mulf %84, %85 : vector<32x128xf32>
    %87 = arith.addf %77, %86 : vector<32x128xf32>
    %cst_33 = arith.constant -0.442812562 : f32
    %88 = vector.broadcast %cst_33 : f32 to vector<32x128xf32>
    %89 = arith.mulf %84, %88 : vector<32x128xf32>
    %90 = arith.addf %80, %89 : vector<32x128xf32>
    %cst_34 = arith.constant -0.930827379 : f32
    %91 = vector.broadcast %cst_34 : f32 to vector<32x128xf32>
    %92 = arith.mulf %84, %91 : vector<32x128xf32>
    %93 = arith.addf %83, %92 : vector<32x128xf32>
    %94 = arith.mulf %55, %56 : vector<32x128xf32>
    %cst_35 = arith.constant 1.36428881 : f32
    %95 = vector.broadcast %cst_35 : f32 to vector<32x128xf32>
    %96 = arith.mulf %94, %95 : vector<32x128xf32>
    %97 = arith.addf %87, %96 : vector<32x128xf32>
    %cst_36 = arith.constant 1.16915798 : f32
    %98 = vector.broadcast %cst_36 : f32 to vector<32x128xf32>
    %99 = arith.mulf %94, %98 : vector<32x128xf32>
    %100 = arith.addf %90, %99 : vector<32x128xf32>
    %cst_37 = arith.constant 0.296838492 : f32
    %101 = vector.broadcast %cst_37 : f32 to vector<32x128xf32>
    %102 = arith.mulf %94, %101 : vector<32x128xf32>
    %103 = arith.addf %93, %102 : vector<32x128xf32>
    %cst_38 = arith.constant 2.000000e+00 : f32
    %104 = vector.broadcast %cst_38 : f32 to vector<32x128xf32>
    %105 = arith.mulf %104, %59 : vector<32x128xf32>
    %106 = arith.subf %105, %57 : vector<32x128xf32>
    %107 = arith.subf %106, %58 : vector<32x128xf32>
    %cst_39 = arith.constant 0.29334566 : f32
    %108 = vector.broadcast %cst_39 : f32 to vector<32x128xf32>
    %109 = arith.mulf %107, %108 : vector<32x128xf32>
    %110 = arith.addf %97, %109 : vector<32x128xf32>
    %cst_40 = arith.constant 0.573597133 : f32
    %111 = vector.broadcast %cst_40 : f32 to vector<32x128xf32>
    %112 = arith.mulf %107, %111 : vector<32x128xf32>
    %113 = arith.addf %100, %112 : vector<32x128xf32>
    %cst_41 = arith.constant -2.17558432 : f32
    %114 = vector.broadcast %cst_41 : f32 to vector<32x128xf32>
    %115 = arith.mulf %107, %114 : vector<32x128xf32>
    %116 = arith.addf %103, %115 : vector<32x128xf32>
    %117 = arith.mulf %56, %54 : vector<32x128xf32>
    %cst_42 = arith.constant 0.0124890041 : f32
    %118 = vector.broadcast %cst_42 : f32 to vector<32x128xf32>
    %119 = arith.mulf %117, %118 : vector<32x128xf32>
    %120 = arith.addf %110, %119 : vector<32x128xf32>
    %cst_43 = arith.constant -0.883968234 : f32
    %121 = vector.broadcast %cst_43 : f32 to vector<32x128xf32>
    %122 = arith.mulf %117, %121 : vector<32x128xf32>
    %123 = arith.addf %113, %122 : vector<32x128xf32>
    %cst_44 = arith.constant 0.961443126 : f32
    %124 = vector.broadcast %cst_44 : f32 to vector<32x128xf32>
    %125 = arith.mulf %117, %124 : vector<32x128xf32>
    %126 = arith.addf %116, %125 : vector<32x128xf32>
    %127 = arith.subf %57, %58 : vector<32x128xf32>
    %cst_45 = arith.constant 1.07518399 : f32
    %128 = vector.broadcast %cst_45 : f32 to vector<32x128xf32>
    %129 = arith.mulf %127, %128 : vector<32x128xf32>
    %130 = arith.addf %120, %129 : vector<32x128xf32>
    %cst_46 = arith.constant -0.0997103899 : f32
    %131 = vector.broadcast %cst_46 : f32 to vector<32x128xf32>
    %132 = arith.mulf %127, %131 : vector<32x128xf32>
    %133 = arith.addf %123, %132 : vector<32x128xf32>
    %cst_47 = arith.constant -1.67092311 : f32
    %134 = vector.broadcast %cst_47 : f32 to vector<32x128xf32>
    %135 = arith.mulf %127, %134 : vector<32x128xf32>
    %136 = arith.addf %126, %135 : vector<32x128xf32>
    %cst_48 = arith.constant -1.02088535 : f32
    %137 = vector.broadcast %cst_48 : f32 to vector<32x128xf32>
    %138 = arith.addf %130, %137 : vector<32x128xf32>
    %cst_49 = arith.constant 0.60980767 : f32
    %139 = vector.broadcast %cst_49 : f32 to vector<32x128xf32>
    %140 = arith.addf %133, %139 : vector<32x128xf32>
    %cst_50 = arith.constant -1.29416931 : f32
    %141 = vector.broadcast %cst_50 : f32 to vector<32x128xf32>
    %142 = arith.addf %136, %141 : vector<32x128xf32>
    %cst_51 = arith.constant 0.000000e+00 : f32
    %143 = vector.broadcast %cst_51 : f32 to vector<16x128xf32>
    %cst_52 = arith.constant 0.000000e+00 : f32
    %144 = vector.broadcast %cst_52 : f32 to vector<16x128xf32>
    %145 = arith.mulf %138, %8 : vector<32x128xf32>
    %c31_i32_53 = arith.constant 31 : i32
    %146 = tpu.dynamic_rotate %145 by %c31_i32_53 dim 0 : vector<32x128xf32>, i32 -> vector<32x128xf32>
    %147 = arith.addf %145, %146 : vector<32x128xf32>
    %c1_i32_54 = arith.constant 1 : i32
    %148 = tpu.dynamic_rotate %145 by %c1_i32_54 dim 0 : vector<32x128xf32>, i32 -> vector<32x128xf32>
    %149 = arith.addf %147, %148 : vector<32x128xf32>
    %c127_i32_55 = arith.constant 127 : i32
    %150 = tpu.dynamic_rotate %149 by %c127_i32_55 dim 1 : vector<32x128xf32>, i32 -> vector<32x128xf32>
    %cst_56 = arith.constant 0.000000e+00 : f32
    %151 = vector.broadcast %cst_56 : f32 to vector<32x128xf32>
    %152 = arith.select %2, %150, %151 : vector<32x128xi1>, vector<32x128xf32>
    %153 = arith.addf %149, %152 : vector<32x128xf32>
    %c1_i32_57 = arith.constant 1 : i32
    %154 = tpu.dynamic_rotate %149 by %c1_i32_57 dim 1 : vector<32x128xf32>, i32 -> vector<32x128xf32>
    %cst_58 = arith.constant 0.000000e+00 : f32
    %155 = vector.broadcast %cst_58 : f32 to vector<32x128xf32>
    %156 = arith.select %4, %154, %155 : vector<32x128xi1>, vector<32x128xf32>
    %157 = arith.addf %153, %156 : vector<32x128xf32>
    %cst_59 = arith.constant 0.111111112 : f32
    %158 = vector.broadcast %cst_59 : f32 to vector<32x128xf32>
    %159 = arith.mulf %157, %158 : vector<32x128xf32>
    %160 = vector.extract_strided_slice %145 {offsets = [8, 0], sizes = [16, 128], strides = [1, 1]} : vector<32x128xf32> to vector<16x128xf32>
    %161 = vector.extract_strided_slice %159 {offsets = [8, 0], sizes = [16, 128], strides = [1, 1]} : vector<32x128xf32> to vector<16x128xf32>
    %162 = arith.subf %160, %161 : vector<16x128xf32>
    %c0_60 = arith.constant 0 : index
    %c0_61 = arith.constant 0 : index
    %c0_62 = arith.constant 0 : index
    %163 = vector.load %arg5[%c0_60, %c0_61, %c0_62] : memref<3x16x128xf32, #tpu.memory_space<vmem>>, vector<1x16x128xf32>
    %164 = vector.shape_cast %163 : vector<1x16x128xf32> to vector<16x128xf32>
    %165 = arith.subf %162, %164 : vector<16x128xf32>
    %166 = arith.mulf %165, %165 : vector<16x128xf32>
    %167 = arith.addf %143, %166 : vector<16x128xf32>
    %168 = arith.addf %12, %19 : vector<32x128xf32>
    %c1_i32_63 = arith.constant 1 : i32
    %169 = tpu.dynamic_rotate %12 by %c1_i32_63 dim 0 : vector<32x128xf32>, i32 -> vector<32x128xf32>
    %170 = arith.addf %168, %169 : vector<32x128xf32>
    %c127_i32_64 = arith.constant 127 : i32
    %171 = tpu.dynamic_rotate %170 by %c127_i32_64 dim 1 : vector<32x128xf32>, i32 -> vector<32x128xf32>
    %cst_65 = arith.constant 0.000000e+00 : f32
    %172 = vector.broadcast %cst_65 : f32 to vector<32x128xf32>
    %173 = arith.select %2, %171, %172 : vector<32x128xi1>, vector<32x128xf32>
    %174 = arith.addf %170, %173 : vector<32x128xf32>
    %c1_i32_66 = arith.constant 1 : i32
    %175 = tpu.dynamic_rotate %170 by %c1_i32_66 dim 1 : vector<32x128xf32>, i32 -> vector<32x128xf32>
    %cst_67 = arith.constant 0.000000e+00 : f32
    %176 = vector.broadcast %cst_67 : f32 to vector<32x128xf32>
    %177 = arith.select %4, %175, %176 : vector<32x128xi1>, vector<32x128xf32>
    %178 = arith.addf %174, %177 : vector<32x128xf32>
    %cst_68 = arith.constant 0.111111112 : f32
    %179 = vector.broadcast %cst_68 : f32 to vector<32x128xf32>
    %180 = arith.mulf %178, %179 : vector<32x128xf32>
    %181 = vector.extract_strided_slice %12 {offsets = [8, 0], sizes = [16, 128], strides = [1, 1]} : vector<32x128xf32> to vector<16x128xf32>
    %182 = vector.extract_strided_slice %180 {offsets = [8, 0], sizes = [16, 128], strides = [1, 1]} : vector<32x128xf32> to vector<16x128xf32>
    %183 = arith.subf %181, %182 : vector<16x128xf32>
    %184 = arith.mulf %183, %183 : vector<16x128xf32>
    %185 = arith.addf %144, %184 : vector<16x128xf32>
    %186 = arith.mulf %140, %8 : vector<32x128xf32>
    %c31_i32_69 = arith.constant 31 : i32
    %187 = tpu.dynamic_rotate %186 by %c31_i32_69 dim 0 : vector<32x128xf32>, i32 -> vector<32x128xf32>
    %188 = arith.addf %186, %187 : vector<32x128xf32>
    %c1_i32_70 = arith.constant 1 : i32
    %189 = tpu.dynamic_rotate %186 by %c1_i32_70 dim 0 : vector<32x128xf32>, i32 -> vector<32x128xf32>
    %190 = arith.addf %188, %189 : vector<32x128xf32>
    %c127_i32_71 = arith.constant 127 : i32
    %191 = tpu.dynamic_rotate %190 by %c127_i32_71 dim 1 : vector<32x128xf32>, i32 -> vector<32x128xf32>
    %cst_72 = arith.constant 0.000000e+00 : f32
    %192 = vector.broadcast %cst_72 : f32 to vector<32x128xf32>
    %193 = arith.select %2, %191, %192 : vector<32x128xi1>, vector<32x128xf32>
    %194 = arith.addf %190, %193 : vector<32x128xf32>
    %c1_i32_73 = arith.constant 1 : i32
    %195 = tpu.dynamic_rotate %190 by %c1_i32_73 dim 1 : vector<32x128xf32>, i32 -> vector<32x128xf32>
    %cst_74 = arith.constant 0.000000e+00 : f32
    %196 = vector.broadcast %cst_74 : f32 to vector<32x128xf32>
    %197 = arith.select %4, %195, %196 : vector<32x128xi1>, vector<32x128xf32>
    %198 = arith.addf %194, %197 : vector<32x128xf32>
    %cst_75 = arith.constant 0.111111112 : f32
    %199 = vector.broadcast %cst_75 : f32 to vector<32x128xf32>
    %200 = arith.mulf %198, %199 : vector<32x128xf32>
    %201 = vector.extract_strided_slice %186 {offsets = [8, 0], sizes = [16, 128], strides = [1, 1]} : vector<32x128xf32> to vector<16x128xf32>
    %202 = vector.extract_strided_slice %200 {offsets = [8, 0], sizes = [16, 128], strides = [1, 1]} : vector<32x128xf32> to vector<16x128xf32>
    %203 = arith.subf %201, %202 : vector<16x128xf32>
    %c1_76 = arith.constant 1 : index
    %c0_77 = arith.constant 0 : index
    %c0_78 = arith.constant 0 : index
    %204 = vector.load %arg5[%c1_76, %c0_77, %c0_78] : memref<3x16x128xf32, #tpu.memory_space<vmem>>, vector<1x16x128xf32>
    %205 = vector.shape_cast %204 : vector<1x16x128xf32> to vector<16x128xf32>
    %206 = arith.subf %203, %205 : vector<16x128xf32>
    %207 = arith.mulf %206, %206 : vector<16x128xf32>
    %208 = arith.addf %167, %207 : vector<16x128xf32>
    %209 = arith.addf %15, %20 : vector<32x128xf32>
    %c1_i32_79 = arith.constant 1 : i32
    %210 = tpu.dynamic_rotate %15 by %c1_i32_79 dim 0 : vector<32x128xf32>, i32 -> vector<32x128xf32>
    %211 = arith.addf %209, %210 : vector<32x128xf32>
    %c127_i32_80 = arith.constant 127 : i32
    %212 = tpu.dynamic_rotate %211 by %c127_i32_80 dim 1 : vector<32x128xf32>, i32 -> vector<32x128xf32>
    %cst_81 = arith.constant 0.000000e+00 : f32
    %213 = vector.broadcast %cst_81 : f32 to vector<32x128xf32>
    %214 = arith.select %2, %212, %213 : vector<32x128xi1>, vector<32x128xf32>
    %215 = arith.addf %211, %214 : vector<32x128xf32>
    %c1_i32_82 = arith.constant 1 : i32
    %216 = tpu.dynamic_rotate %211 by %c1_i32_82 dim 1 : vector<32x128xf32>, i32 -> vector<32x128xf32>
    %cst_83 = arith.constant 0.000000e+00 : f32
    %217 = vector.broadcast %cst_83 : f32 to vector<32x128xf32>
    %218 = arith.select %4, %216, %217 : vector<32x128xi1>, vector<32x128xf32>
    %219 = arith.addf %215, %218 : vector<32x128xf32>
    %cst_84 = arith.constant 0.111111112 : f32
    %220 = vector.broadcast %cst_84 : f32 to vector<32x128xf32>
    %221 = arith.mulf %219, %220 : vector<32x128xf32>
    %222 = vector.extract_strided_slice %15 {offsets = [8, 0], sizes = [16, 128], strides = [1, 1]} : vector<32x128xf32> to vector<16x128xf32>
    %223 = vector.extract_strided_slice %221 {offsets = [8, 0], sizes = [16, 128], strides = [1, 1]} : vector<32x128xf32> to vector<16x128xf32>
    %224 = arith.subf %222, %223 : vector<16x128xf32>
    %225 = arith.mulf %224, %224 : vector<16x128xf32>
    %226 = arith.addf %185, %225 : vector<16x128xf32>
    %227 = arith.mulf %142, %8 : vector<32x128xf32>
    %c31_i32_85 = arith.constant 31 : i32
    %228 = tpu.dynamic_rotate %227 by %c31_i32_85 dim 0 : vector<32x128xf32>, i32 -> vector<32x128xf32>
    %229 = arith.addf %227, %228 : vector<32x128xf32>
    %c1_i32_86 = arith.constant 1 : i32
    %230 = tpu.dynamic_rotate %227 by %c1_i32_86 dim 0 : vector<32x128xf32>, i32 -> vector<32x128xf32>
    %231 = arith.addf %229, %230 : vector<32x128xf32>
    %c127_i32_87 = arith.constant 127 : i32
    %232 = tpu.dynamic_rotate %231 by %c127_i32_87 dim 1 : vector<32x128xf32>, i32 -> vector<32x128xf32>
    %cst_88 = arith.constant 0.000000e+00 : f32
    %233 = vector.broadcast %cst_88 : f32 to vector<32x128xf32>
    %234 = arith.select %2, %232, %233 : vector<32x128xi1>, vector<32x128xf32>
    %235 = arith.addf %231, %234 : vector<32x128xf32>
    %c1_i32_89 = arith.constant 1 : i32
    %236 = tpu.dynamic_rotate %231 by %c1_i32_89 dim 1 : vector<32x128xf32>, i32 -> vector<32x128xf32>
    %cst_90 = arith.constant 0.000000e+00 : f32
    %237 = vector.broadcast %cst_90 : f32 to vector<32x128xf32>
    %238 = arith.select %4, %236, %237 : vector<32x128xi1>, vector<32x128xf32>
    %239 = arith.addf %235, %238 : vector<32x128xf32>
    %cst_91 = arith.constant 0.111111112 : f32
    %240 = vector.broadcast %cst_91 : f32 to vector<32x128xf32>
    %241 = arith.mulf %239, %240 : vector<32x128xf32>
    %242 = vector.extract_strided_slice %227 {offsets = [8, 0], sizes = [16, 128], strides = [1, 1]} : vector<32x128xf32> to vector<16x128xf32>
    %243 = vector.extract_strided_slice %241 {offsets = [8, 0], sizes = [16, 128], strides = [1, 1]} : vector<32x128xf32> to vector<16x128xf32>
    %244 = arith.subf %242, %243 : vector<16x128xf32>
    %c2_92 = arith.constant 2 : index
    %c0_93 = arith.constant 0 : index
    %c0_94 = arith.constant 0 : index
    %245 = vector.load %arg5[%c2_92, %c0_93, %c0_94] : memref<3x16x128xf32, #tpu.memory_space<vmem>>, vector<1x16x128xf32>
    %246 = vector.shape_cast %245 : vector<1x16x128xf32> to vector<16x128xf32>
    %247 = arith.subf %244, %246 : vector<16x128xf32>
    %248 = arith.mulf %247, %247 : vector<16x128xf32>
    %249 = arith.addf %208, %248 : vector<16x128xf32>
    %250 = arith.addf %18, %21 : vector<32x128xf32>
    %c1_i32_95 = arith.constant 1 : i32
    %251 = tpu.dynamic_rotate %18 by %c1_i32_95 dim 0 : vector<32x128xf32>, i32 -> vector<32x128xf32>
    %252 = arith.addf %250, %251 : vector<32x128xf32>
    %c127_i32_96 = arith.constant 127 : i32
    %253 = tpu.dynamic_rotate %252 by %c127_i32_96 dim 1 : vector<32x128xf32>, i32 -> vector<32x128xf32>
    %cst_97 = arith.constant 0.000000e+00 : f32
    %254 = vector.broadcast %cst_97 : f32 to vector<32x128xf32>
    %255 = arith.select %2, %253, %254 : vector<32x128xi1>, vector<32x128xf32>
    %256 = arith.addf %252, %255 : vector<32x128xf32>
    %c1_i32_98 = arith.constant 1 : i32
    %257 = tpu.dynamic_rotate %252 by %c1_i32_98 dim 1 : vector<32x128xf32>, i32 -> vector<32x128xf32>
    %cst_99 = arith.constant 0.000000e+00 : f32
    %258 = vector.broadcast %cst_99 : f32 to vector<32x128xf32>
    %259 = arith.select %4, %257, %258 : vector<32x128xi1>, vector<32x128xf32>
    %260 = arith.addf %256, %259 : vector<32x128xf32>
    %cst_100 = arith.constant 0.111111112 : f32
    %261 = vector.broadcast %cst_100 : f32 to vector<32x128xf32>
    %262 = arith.mulf %260, %261 : vector<32x128xf32>
    %263 = vector.extract_strided_slice %18 {offsets = [8, 0], sizes = [16, 128], strides = [1, 1]} : vector<32x128xf32> to vector<16x128xf32>
    %264 = vector.extract_strided_slice %262 {offsets = [8, 0], sizes = [16, 128], strides = [1, 1]} : vector<32x128xf32> to vector<16x128xf32>
    %265 = arith.subf %263, %264 : vector<16x128xf32>
    %266 = arith.mulf %265, %265 : vector<16x128xf32>
    %267 = arith.addf %226, %266 : vector<16x128xf32>
    %268 = vector.extract_strided_slice %6 {offsets = [8, 0], sizes = [16, 128], strides = [1, 1]} : vector<32x128xf32> to vector<16x128xf32>
    %c0_101 = arith.constant 0 : index
    %c0_102 = arith.constant 0 : index
    %269 = vector.load %arg2[%c0_101, %c0_102] : memref<16x128xf32, #tpu.memory_space<vmem>>, vector<16x128xf32>
    %270 = arith.subf %268, %269 : vector<16x128xf32>
    %271 = arith.mulf %9, %249 : vector<16x128xf32>
    %272 = vector.extract_strided_slice %271 {offsets = [0, 0], sizes = [8, 128], strides = [1, 1]} : vector<16x128xf32> to vector<8x128xf32>
    %273 = vector.extract_strided_slice %271 {offsets = [8, 0], sizes = [8, 128], strides = [1, 1]} : vector<16x128xf32> to vector<8x128xf32>
    %274 = arith.addf %272, %273 : vector<8x128xf32>
    %c0_103 = arith.constant 0 : index
    %c0_104 = arith.constant 0 : index
    %c0_105 = arith.constant 0 : index
    %c0_106 = arith.constant 0 : index
    %275 = vector.load %arg6[%c0_103, %c0_104, %c0_105, %c0_106] : memref<1x3x8x128xf32, #tpu.memory_space<vmem>>, vector<1x1x8x128xf32>
    %276 = vector.shape_cast %275 : vector<1x1x8x128xf32> to vector<8x128xf32>
    %277 = vector.shape_cast %274 : vector<8x128xf32> to vector<1x1x8x128xf32>
    tpu.vector_store %arg6[%c0_103, %c0_104, %c0_105, %c0_106], %277 {strides = array<i32>} : memref<1x3x8x128xf32, #tpu.memory_space<vmem>>, vector<1x1x8x128xf32>,
    %278 = arith.mulf %9, %267 : vector<16x128xf32>
    %279 = vector.extract_strided_slice %278 {offsets = [0, 0], sizes = [8, 128], strides = [1, 1]} : vector<16x128xf32> to vector<8x128xf32>
    %280 = vector.extract_strided_slice %278 {offsets = [8, 0], sizes = [8, 128], strides = [1, 1]} : vector<16x128xf32> to vector<8x128xf32>
    %281 = arith.addf %279, %280 : vector<8x128xf32>
    %c0_107 = arith.constant 0 : index
    %c1_108 = arith.constant 1 : index
    %c0_109 = arith.constant 0 : index
    %c0_110 = arith.constant 0 : index
    %282 = vector.load %arg6[%c0_107, %c1_108, %c0_109, %c0_110] : memref<1x3x8x128xf32, #tpu.memory_space<vmem>>, vector<1x1x8x128xf32>
    %283 = vector.shape_cast %282 : vector<1x1x8x128xf32> to vector<8x128xf32>
    %284 = vector.shape_cast %281 : vector<8x128xf32> to vector<1x1x8x128xf32>
    tpu.vector_store %arg6[%c0_107, %c1_108, %c0_109, %c0_110], %284 {strides = array<i32>} : memref<1x3x8x128xf32, #tpu.memory_space<vmem>>, vector<1x1x8x128xf32>,
    %285 = arith.mulf %270, %270 : vector<16x128xf32>
    %286 = vector.extract_strided_slice %285 {offsets = [0, 0], sizes = [8, 128], strides = [1, 1]} : vector<16x128xf32> to vector<8x128xf32>
    %287 = vector.extract_strided_slice %285 {offsets = [8, 0], sizes = [8, 128], strides = [1, 1]} : vector<16x128xf32> to vector<8x128xf32>
    %288 = arith.addf %286, %287 : vector<8x128xf32>
    %c0_111 = arith.constant 0 : index
    %c2_112 = arith.constant 2 : index
    %c0_113 = arith.constant 0 : index
    %c0_114 = arith.constant 0 : index
    %289 = vector.load %arg6[%c0_111, %c2_112, %c0_113, %c0_114] : memref<1x3x8x128xf32, #tpu.memory_space<vmem>>, vector<1x1x8x128xf32>
    %290 = vector.shape_cast %289 : vector<1x1x8x128xf32> to vector<8x128xf32>
    %291 = vector.shape_cast %288 : vector<8x128xf32> to vector<1x1x8x128xf32>
    tpu.vector_store %arg6[%c0_111, %c2_112, %c0_113, %c0_114], %291 {strides = array<i32>} : memref<1x3x8x128xf32, #tpu.memory_space<vmem>>, vector<1x1x8x128xf32>,
    return
  }
  func.func @transform_0(%arg0: i32) -> (i32, i32, i32) {
    %c0_i32 = arith.constant 0 : i32
    %c0_i32_0 = arith.constant 0 : i32
    %c0_i32_1 = arith.constant 0 : i32
    return %arg0, %c0_i32, %c0_i32_0 : i32, i32, i32
  }
  func.func @transform_1(%arg0: i32) -> (i32, i32) {
    %c0_i32 = arith.constant 0 : i32
    %c0_i32_0 = arith.constant 0 : i32
    return %arg0, %c0_i32 : i32, i32
  }
  func.func @transform_2(%arg0: i32) -> (i32, i32, i32) {
    %c0_i32 = arith.constant 0 : i32
    %c0_i32_0 = arith.constant 0 : i32
    %c0_i32_1 = arith.constant 0 : i32
    return %arg0, %c0_i32, %c0_i32_0 : i32, i32, i32
  }
  func.func @transform_3(%arg0: i32) -> (i32, i32, i32, i32) {
    %c0_i32 = arith.constant 0 : i32
    %c0_i32_0 = arith.constant 0 : i32
    %c0_i32_1 = arith.constant 0 : i32
    %c0_i32_2 = arith.constant 0 : i32
    return %arg0, %c0_i32, %c0_i32_0, %c0_i32_1 : i32, i32, i32, i32
  }
  func.func @transform_4(%arg0: i32) -> (i32, i32, i32) {
    %c0_i32 = arith.constant 0 : i32
    %c0_i32_0 = arith.constant 0 : i32
    %c0_i32_1 = arith.constant 0 : i32
    return %c0_i32, %arg0, %c0_i32_0 : i32, i32, i32
  }
  func.func @transform_5(%arg0: i32) -> (i32, i32, i32, i32) {
    %c0_i32 = arith.constant 0 : i32
    %c0_i32_0 = arith.constant 0 : i32
    %c0_i32_1 = arith.constant 0 : i32
    %c0_i32_2 = arith.constant 0 : i32
    return %arg0, %c0_i32, %c0_i32_0, %c0_i32_1 : i32, i32, i32, i32
  }
}

</mosaic_0001>

<llo_original>
// kernel: loss_all.1
$region0: #{loss_all.1}
  #allocation0 [shape = 'u32[]', space=smem, size = 0x4, offset = 0x4, fixed_abs, tag = 'smem constant byte address 0x4 - core index']
  #allocation1 [shape = 'u32[144,128]{1,0:T(1,128)}', space=vmem, size = 0x12000, scoped, tag = 'internal scratch']
  #allocation6 [shape = 's32[]', space=sflag, size = 0x4, offset = 0, fixed_abs, tag = 'sflag constant byte address 0x0 - dummy sync flag']
  %s0 = inlined_call_operand.vmem [shape: f32[2,32,128], index: 0, kind: input, shape index: {}]
  %s1 = inlined_call_operand.hbm [shape: f32[32,128], index: 1, kind: input, shape index: {}]
  %s2 = inlined_call_operand.vmem [shape: f32[2,32,128], index: 2, kind: input, shape index: {}]
  %s3 = inlined_call_operand.vmem [shape: f32[2,3,32,128], index: 3, kind: input, shape index: {}]
  %s4 = inlined_call_operand.hbm [shape: f32[3,32,128], index: 4, kind: input, shape index: {}]
  %s5 = inlined_call_operand.vmem [shape: f32[2,3,8,128], index: 5, kind: output, shape index: {}]
  %s6 = sld [smem:[#allocation0]]
  $region61: #{loss_all.1} parent=0
    _
  %s8 = ssub.s32 1, %s6
  %s9 = scalar_select 0, %s8, %s6
  $region1: #{loss_all.1} parent=0
    #allocation2 [shape = 'u8[16384]{0}', space=vmem, size = 0x4000, scoped, tag = 'input window, operand 1']
    #allocation3 [shape = 's32[2]{0}', space=sflag, size = 0x8, scoped, tag = 'scoped memory for loss_all.1']
    #allocation4 [shape = 'u8[49152]{0}', space=vmem, size = 0xc000, scoped, tag = 'input window, operand 4']
    #allocation5 [shape = 's32[2]{0}', space=sflag, size = 0x8, scoped, tag = 'scoped memory for loss_all.1']
    %10 = vsyncpa [#allocation3], 0
    %s11 = scalar_lea.sflag [#allocation3], 1
    %12 = vsyncpa %s11, 0
    %13 = vsyncpa [#allocation5], 0
    %s14 = scalar_lea.sflag [#allocation5], 1
    %15 = vsyncpa %s14, 0
    loop: start=0, step=1, limit=4
    $region2: #{loss_all.1} parent=1 // loop_pre_header
      _
    $region3: #{loss_all.1} parent=1 // loop_header
      %s17 = sphi 0, %s21
      %p18 = scmp.ge.s32.totalorder %s17, 4
      %s27 = sphi 0, %s29
      %s30 = sphi 0, %s27
      %s31 = sphi 0, %s30
      %s47 = sphi 0, %s31
      %s53 = sphi 0, %s55
      %s56 = sphi 0, %s53
      %s57 = sphi 0, %s56
      %s73 = sphi 0, %s57
      %s79 = sphi 0, %s81
      %s82 = sphi 0, %s79
      %s83 = sphi 0, %s82
      %s99 = sphi 0, %s83
      %s105 = sphi 0, %s107
      %s108 = sphi 0, %s105
      %s109 = sphi 0, %s108
      %s125 = sphi 0, %s109
      %s131 = sphi 0, %s133
      %s134 = sphi 0, %s131
      %s135 = sphi 0, %s134
      %s151 = sphi 0, %s135
      %s157 = sphi 0, %s159
      %s160 = sphi 0, %s157
      %s161 = sphi 0, %s160
      %s177 = sphi 0, %s161
    $region4: #{loss_all.1} parent=1 // loop_header_branch
      %20 = sbr.rel (%p18) target = $region8
    $region5: #{loss_all.1} parent=1 // loop_body
      %s22 = ssub.s32 %s17, 1
      %s23 = ssub.s32 %s17, 2
      %s24 = sadd.s32 %s17, 1
      %s25 = ssub.s32 %s17, %s24
      %p26 = scmp.eq.s32.totalorder %s25, 0
      %s28 = sadd.s32 %s27, 1
      %s29 = scalar_select %p26, %s27, %s28
      %p32 = pneg %p26
      %p33 = scmp.eq.s32.totalorder %s17, 1
      %p34 = por %p32, %p33
      %p35 = scmp.ne.s32.totalorder %s27, %s30
      %p36 = scmp.eq.s32.totalorder %s17, 0
      %p37 = por %p35, %p36
      %p38 = scmp.ne.s32.totalorder %s27, %s30
      %p39 = scmp.eq.s32.totalorder %s22, 1
      %p40 = por %p38, %p39
      %p41 = scmp.ne.s32.totalorder %s30, %s31
      %p42 = scmp.eq.s32.totalorder %s22, 0
      %p43 = por %p41, %p42
      %p44 = scmp.ne.s32.totalorder %s30, %s31
      %p45 = scmp.eq.s32.totalorder %s23, 1
      %p46 = por %p44, %p45
      %p48 = scmp.ne.s32.totalorder %s31, %s47
      %p49 = scmp.eq.s32.totalorder %s23, 0
      %p50 = por %p48, %p49
      %s51 = ssub.s32 %s17, %s24
      %p52 = scmp.eq.s32.totalorder %s51, 0
      %s54 = sadd.s32 %s53, 1
      %s55 = scalar_select %p52, %s53, %s54
      %p58 = pneg %p52
      %p59 = scmp.eq.s32.totalorder %s17, 1
      %p60 = por %p58, %p59
      %p61 = scmp.ne.s32.totalorder %s53, %s56
      %p62 = scmp.eq.s32.totalorder %s17, 0
      %p63 = por %p61, %p62
      %p64 = scmp.ne.s32.totalorder %s53, %s56
      %p65 = scmp.eq.s32.totalorder %s22, 1
      %p66 = por %p64, %p65
      %p67 = scmp.ne.s32.totalorder %s56, %s57
      %p68 = scmp.eq.s32.totalorder %s22, 0
      %p69 = por %p67, %p68
      %p70 = scmp.ne.s32.totalorder %s56, %s57
      %p71 = scmp.eq.s32.totalorder %s23, 1
      %p72 = por %p70, %p71
      %p74 = scmp.ne.s32.totalorder %s57, %s73
      %p75 = scmp.eq.s32.totalorder %s23, 0
      %p76 = por %p74, %p75
      %s77 = ssub.s32 %s17, %s24
      %p78 = scmp.eq.s32.totalorder %s77, 0
      %s80 = sadd.s32 %s79, 1
      %s81 = scalar_select %p78, %s79, %s80
      %p84 = pneg %p78
      %p85 = scmp.eq.s32.totalorder %s17, 1
      %p86 = por %p84, %p85
      %p87 = scmp.ne.s32.totalorder %s79, %s82
      %p88 = scmp.eq.s32.totalorder %s17, 0
      %p89 = por %p87, %p88
      %p90 = scmp.ne.s32.totalorder %s79, %s82
      %p91 = scmp.eq.s32.totalorder %s22, 1
      %p92 = por %p90, %p91
      %p93 = scmp.ne.s32.totalorder %s82, %s83
      %p94 = scmp.eq.s32.totalorder %s22, 0
      %p95 = por %p93, %p94
      %p96 = scmp.ne.s32.totalorder %s82, %s83
      %p97 = scmp.eq.s32.totalorder %s23, 1
      %p98 = por %p96, %p97
      %p100 = scmp.ne.s32.totalorder %s83, %s99
      %p101 = scmp.eq.s32.totalorder %s23, 0
      %p102 = por %p100, %p101
      %s103 = ssub.s32 %s17, %s24
      %p104 = scmp.eq.s32.totalorder %s103, 0
      %s106 = sadd.s32 %s105, 1
      %s107 = scalar_select %p104, %s105, %s106
      %p110 = pneg %p104
      %p111 = scmp.eq.s32.totalorder %s17, 1
      %p112 = por %p110, %p111
      %p113 = scmp.ne.s32.totalorder %s105, %s108
      %p114 = scmp.eq.s32.totalorder %s17, 0
      %p115 = por %p113, %p114
      %p116 = scmp.ne.s32.totalorder %s105, %s108
      %p117 = scmp.eq.s32.totalorder %s22, 1
      %p118 = por %p116, %p117
      %p119 = scmp.ne.s32.totalorder %s108, %s109
      %p120 = scmp.eq.s32.totalorder %s22, 0
      %p121 = por %p119, %p120
      %p122 = scmp.ne.s32.totalorder %s108, %s109
      %p123 = scmp.eq.s32.totalorder %s23, 1
      %p124 = por %p122, %p123
      %p126 = scmp.ne.s32.totalorder %s109, %s125
      %p127 = scmp.eq.s32.totalorder %s23, 0
      %p128 = por %p126, %p127
      %s129 = ssub.s32 %s17, %s24
      %p130 = scmp.eq.s32.totalorder %s129, 0
      %s132 = sadd.s32 %s131, 1
      %s133 = scalar_select %p130, %s131, %s132
      %p136 = pneg %p130
      %p137 = scmp.eq.s32.totalorder %s17, 1
      %p138 = por %p136, %p137
      %p139 = scmp.ne.s32.totalorder %s131, %s134
      %p140 = scmp.eq.s32.totalorder %s17, 0
      %p141 = por %p139, %p140
      %p142 = scmp.ne.s32.totalorder %s131, %s134
      %p143 = scmp.eq.s32.totalorder %s22, 1
      %p144 = por %p142, %p143
      %p145 = scmp.ne.s32.totalorder %s134, %s135
      %p146 = scmp.eq.s32.totalorder %s22, 0
      %p147 = por %p145, %p146
      %p148 = scmp.ne.s32.totalorder %s134, %s135
      %p149 = scmp.eq.s32.totalorder %s23, 1
      %p150 = por %p148, %p149
      %p152 = scmp.ne.s32.totalorder %s135, %s151
      %p153 = scmp.eq.s32.totalorder %s23, 0
      %p154 = por %p152, %p153
      %s155 = ssub.s32 %s17, %s24
      %p156 = scmp.eq.s32.totalorder %s155, 0
      %s158 = sadd.s32 %s157, 1
      %s159 = scalar_select %p156, %s157, %s158
      %p162 = pneg %p156
      %p163 = scmp.eq.s32.totalorder %s17, 1
      %p164 = por %p162, %p163
      %p165 = scmp.ne.s32.totalorder %s157, %s160
      %p166 = scmp.eq.s32.totalorder %s17, 0
      %p167 = por %p165, %p166
      %p168 = scmp.ne.s32.totalorder %s157, %s160
      %p169 = scmp.eq.s32.totalorder %s22, 1
      %p170 = por %p168, %p169
      %p171 = scmp.ne.s32.totalorder %s160, %s161
      %p172 = scmp.eq.s32.totalorder %s22, 0
      %p173 = por %p171, %p172
      %p174 = scmp.ne.s32.totalorder %s160, %s161
      %p175 = scmp.eq.s32.totalorder %s23, 1
      %p176 = por %p174, %p175
      %p178 = scmp.ne.s32.totalorder %s161, %s177
      %p179 = scmp.eq.s32.totalorder %s23, 0
      %p180 = por %p178, %p179
      %p181 = scmp.le.s32.totalorder 1, %s17
      %p182 = scmp.lt.s32.totalorder %s17, 3
      %p183 = pnand %p181, %p182
      %p184 = pneg %p183
      // Predicated region
      $region9: #{loss_all.1} parent=5 // pred_check
        _
      $region10: #{loss_all.1} parent=5 // pred_check_branch
        %186 = sbr.rel (%p183) target = $region12
      $region11: #{loss_all.1} parent=5 // pred_region
        %s187 = ssub.s32 %s17, 1
      $region12: #{loss_all.1} parent=5 // pred_fallthru
        _
      %p188 = scmp.lt.s32.totalorder %s17, 2
      // Predicated region
      $region13: #{loss_all.1} parent=5 // pred_check
        %p189 = pneg %p188
      $region14: #{loss_all.1} parent=5 // pred_check_branch
        %191 = sbr.rel (%p189) target = $region16
      $region15: #{loss_all.1} parent=5 // pred_region
        // Predicated region
        $region17: #{loss_all.1} parent=15 // pred_check
          %p192 = pneg %p37
        $region18: #{loss_all.1} parent=15 // pred_check_branch
          %194 = sbr.rel (%p192) target = $region20
        $region19: #{loss_all.1} parent=15 // pred_region
          %p195 = scmp.lt.s32.totalorder %s17, 1
          %s196 = scalar_select %p195, %s17, 1
          %s197 = smul.addr %s196, 4
          %s198 = smul.addr %s197, 8
          %s199 = scalar_lea.vmem %s0, %s198
        $region20: #{loss_all.1} parent=15 // pred_fallthru
          _
        // Predicated region
        $region21: #{loss_all.1} parent=15 // pred_check
          %p200 = pneg %p63
        $region22: #{loss_all.1} parent=15 // pred_check_branch
          %202 = sbr.rel (%p200) target = $region24
        $region23: #{loss_all.1} parent=15 // pred_region
          %s203 = sand.u32 %s53, 1
          %s204 = scalar_lea.sflag [#allocation3], %s203
          %s205 = sand.u32 %s53, 1
          %s206 = smul.addr %s205, 16
          %s207 = scalar_lea.vmem [#allocation2], %s206
          %s208 = smul.u32 2, %s17
          %s210 = ssub.s32 256, 256
          %211 = vsyncadd %s204, %s210
          %s212 = smul.addr %s208, 128
          %s213 = scalar_lea.hbm %s1, %s212
          %s214 = sshll.u32 %s207, 4
          %s215 = int_to_ptr.vmem [resolvable:$true] %s214
          %220 = dma.hbm_to_vmem [thread:$0]  %s213, 256, %s215, %s204, 128, 128, 8
        $region24: #{loss_all.1} parent=15 // pred_fallthru
          _
        // Predicated region
        $region25: #{loss_all.1} parent=15 // pred_check
          %p221 = pneg %p89
        $region26: #{loss_all.1} parent=15 // pred_check_branch
          %223 = sbr.rel (%p221) target = $region28
        $region27: #{loss_all.1} parent=15 // pred_region
          %p224 = scmp.lt.s32.totalorder %s17, 1
          %s225 = scalar_select %p224, %s17, 1
          %s226 = smul.addr %s225, 4
          %s227 = smul.addr %s226, 8
          %s228 = scalar_lea.vmem %s2, %s227
        $region28: #{loss_all.1} parent=15 // pred_fallthru
          _
        // Predicated region
        $region29: #{loss_all.1} parent=15 // pred_check
          %p229 = pneg %p115
        $region30: #{loss_all.1} parent=15 // pred_check_branch
          %231 = sbr.rel (%p229) target = $region32
        $region31: #{loss_all.1} parent=15 // pred_region
          %p232 = scmp.lt.s32.totalorder %s17, 1
          %s233 = scalar_select %p232, %s17, 1
          %s234 = smul.addr %s233, 12
          %s235 = smul.addr %s234, 8
          %s236 = scalar_lea.vmem %s3, %s235
        $region32: #{loss_all.1} parent=15 // pred_fallthru
          _
        // Predicated region
        $region33: #{loss_all.1} parent=15 // pred_check
          %p237 = pneg %p141
        $region34: #{loss_all.1} parent=15 // pred_check_branch
          %239 = sbr.rel (%p237) target = $region36
        $region35: #{loss_all.1} parent=15 // pred_region
          #allocation7 [shape = 'u32[6]{0}', space=smem, size = 0x18, scoped, tag = 'DMA stride descriptor']
          %s240 = sand.u32 %s131, 1
          %s241 = scalar_lea.sflag [#allocation5], %s240
          %s242 = sand.u32 %s131, 1
          %s243 = smul.addr %s242, 48
          %s244 = scalar_lea.vmem [#allocation4], %s243
          %s245 = smul.u32 2, %s17
          %s247 = ssub.s32 768, 768
          %248 = vsyncadd %s241, %s247
          %s249 = smul.addr %s245, 128
          %s250 = scalar_lea.hbm %s4, %s249
          %s252 = sshll.u32 1, 14
          %s253 = sxor.u32 4294967295, %s252
          %s255 = sld [smem:[#allocation0]]
          %s256 = sadd.s32 2, %s255
          %s258 = sshll.u32 7, 26
          %s259 = sxor.u32 4294967295, %s258
          %s260 = sand.u32 0, %s259
          %s261 = sshll.u32 %s256, 26
          %s262 = sor.u32 %s260, %s261
          %s263 = sshll.u32 %s244, 4
          %s264 = int_to_ptr.vmem [resolvable:$true] %s263
          %270 = sst [smem:[#allocation7]] 512
          %s271 = scalar_lea.smem [#allocation7], 1
          %272 = sst [smem:[%s271]] 256
          %s273 = scalar_lea.smem [#allocation7], 2
          %274 = sst [smem:[%s273]] 2
          %s275 = scalar_lea.smem [#allocation7], 3
          %276 = sst [smem:[%s275]] 128
          %s277 = scalar_lea.smem [#allocation7], 4
          %278 = sst [smem:[%s277]] 128
          %s279 = scalar_lea.smem [#allocation7], 5
          %280 = sst [smem:[%s279]] 8
          %282 = dma.general %s250, 768, %s264, %s241, [#allocation6], [#allocation7], %s262, 0
        $region36: #{loss_all.1} parent=15 // pred_fallthru
          _
      $region16: #{loss_all.1} parent=5 // pred_fallthru
        _
      %p283 = scmp.le.s32.totalorder 1, %s17
      %p284 = scmp.lt.s32.totalorder %s17, 3
      %p285 = pnand %p283, %p284
      %p286 = pneg %p285
      // Predicated region
      $region37: #{loss_all.1} parent=5 // pred_check
        _
      $region38: #{loss_all.1} parent=5 // pred_check_branch
        %288 = sbr.rel (%p285) target = $region40
      $region39: #{loss_all.1} parent=5 // pred_region
        %s289 = ssub.s32 %s17, 1
        %s290 = sand.u32 %s56, 1
        %s291 = scalar_lea.sflag [#allocation3], %s290
        %s292 = sand.u32 %s56, 1
        %s293 = smul.addr %s292, 16
        %s294 = scalar_lea.vmem [#allocation2], %s293
        // Predicated region
        $region41: #{loss_all.1} parent=39 // pred_check
          %p295 = pneg %p69
        $region42: #{loss_all.1} parent=39 // pred_check_branch
          %297 = sbr.rel (%p295) target = $region44
        $region43: #{loss_all.1} parent=39 // pred_region
          %298 = dma.done %s291, 256
        $region44: #{loss_all.1} parent=39 // pred_fallthru
          _
        %s299 = sand.u32 %s134, 1
        %s300 = scalar_lea.sflag [#allocation5], %s299
        %s301 = sand.u32 %s134, 1
        %s302 = smul.addr %s301, 48
        %s303 = scalar_lea.vmem [#allocation4], %s302
        // Predicated region
        $region45: #{loss_all.1} parent=39 // pred_check
          %p304 = pneg %p147
        $region46: #{loss_all.1} parent=39 // pred_check_branch
          %306 = sbr.rel (%p304) target = $region48
        $region47: #{loss_all.1} parent=39 // pred_region
          %307 = dma.done %s300, 768
        $region48: #{loss_all.1} parent=39 // pred_fallthru
          _
        %p308 = scmp.lt.s32.totalorder %s22, 1
        %s309 = scalar_select %p308, %s22, 1
        %s310 = smul.addr %s309, 4
        %s311 = smul.addr %s310, 8
        %s312 = scalar_lea.vmem %s0, %s311
        %p313 = pneg %p43
        %p314 = pneg %p40
        %s315 = sand.u32 %s56, 1
        %s316 = scalar_lea.sflag [#allocation3], %s315
        %s317 = sand.u32 %s56, 1
        %s318 = smul.addr %s317, 16
        %s319 = scalar_lea.vmem [#allocation2], %s318
        %p320 = pneg %p69
        %p321 = pneg %p66
        %p322 = scmp.lt.s32.totalorder %s22, 1
        %s323 = scalar_select %p322, %s22, 1
        %s324 = smul.addr %s323, 4
        %s325 = smul.addr %s324, 8
        %s326 = scalar_lea.vmem %s2, %s325
        %p327 = pneg %p95
        %p328 = pneg %p92
        %p329 = scmp.lt.s32.totalorder %s22, 1
        %s330 = scalar_select %p329, %s22, 1
        %s331 = smul.addr %s330, 12
        %s332 = smul.addr %s331, 8
        %s333 = scalar_lea.vmem %s3, %s332
        %p334 = pneg %p121
        %p335 = pneg %p118
        %s336 = sand.u32 %s134, 1
        %s337 = scalar_lea.sflag [#allocation5], %s336
        %s338 = sand.u32 %s134, 1
        %s339 = smul.addr %s338, 48
        %s340 = scalar_lea.vmem [#allocation4], %s339
        %p341 = pneg %p147
        %p342 = pneg %p144
        %p343 = pneg %p173
        %p344 = pneg %p170
        %p345 = scmp.lt.s32.totalorder %s22, 1
        %s346 = scalar_select %p345, %s22, 1
        %s347 = smul.addr %s346, 3
        %s348 = smul.addr %s347, 8
        %s349 = scalar_lea.vmem %s5, %s348
        %p350 = scmp.lt.s32.totalorder %s22, 1
        %s351 = scalar_select %p350, %s22, 1
        %s352 = smul.addr %s351, 4
        %s353 = smul.addr %s352, 8
        %s354 = scalar_lea.vmem %s0, %s353
        %s355 = smul.u32 2, %s22
        %p356 = scmp.lt.s32.totalorder %s22, 1
        %s357 = scalar_select %p356, %s22, 1
        %s358 = smul.addr %s357, 4
        %s359 = smul.addr %s358, 8
        %s360 = scalar_lea.vmem %s2, %s359
        %p361 = scmp.lt.s32.totalorder %s22, 1
        %s362 = scalar_select %p361, %s22, 1
        %s363 = smul.addr %s362, 12
        %s364 = smul.addr %s363, 8
        %s365 = scalar_lea.vmem %s3, %s364
        %s366 = smul.u32 2, %s22
        %p367 = scmp.lt.s32.totalorder %s22, 1
        %s368 = scalar_select %p367, %s22, 1
        %s369 = smul.addr %s368, 3
        %s370 = smul.addr %s369, 8
        %s371 = scalar_lea.vmem %s5, %s370
        %v372 = vlaneseq
        %v373 = vand.u32 %v372, 127
        %vm374 = vcmp.lt.s32.totalorder %v373, 127
        %vm375 = vcmp.ge.s32.totalorder %v373, 1
        %v376 = vld [vmem:[%s354] sm:$0xff]
        %v377 = vld [vmem:[%s354 + $0x8] sm:$0xff]
        %v378 = vld [vmem:[%s354 + $0x10] sm:$0xff]
        %v379 = vld [vmem:[%s354 + $0x18] sm:$0xff]
        %v380 = vld [vmem:[%s360] sm:$0xff]
        %v381 = vld [vmem:[%s360 + $0x8] sm:$0xff]
        %v382 = vld [vmem:[%s360 + $0x10] sm:$0xff]
        %v383 = vld [vmem:[%s360 + $0x18] sm:$0xff]
        %v384 = vld [vmem:[%s365] sm:$0xff]
        %v385 = vld [vmem:[%s365 + $0x8] sm:$0xff]
        %v386 = vld [vmem:[%s365 + $0x10] sm:$0xff]
        %v387 = vld [vmem:[%s365 + $0x18] sm:$0xff]
        %v388 = vmul.f32 %v384, %v376
        %v389 = vmul.f32 %v385, %v377
        %v390 = vmul.f32 %v386, %v378
        %v391 = vmul.f32 %v387, %v379
        %s392 = scalar_lea.vmem %s365, 32
        %v393 = vld [vmem:[%s392] sm:$0xff]
        %v394 = vld [vmem:[%s392 + $0x8] sm:$0xff]
        %v395 = vld [vmem:[%s392 + $0x10] sm:$0xff]
        %v396 = vld [vmem:[%s392 + $0x18] sm:$0xff]
        %v397 = vmul.f32 %v393, %v376
        %v398 = vmul.f32 %v394, %v377
        %v399 = vmul.f32 %v395, %v378
        %v400 = vmul.f32 %v396, %v379
        %s401 = scalar_lea.vmem %s365, 64
        %v402 = vld [vmem:[%s401] sm:$0xff]
        %v403 = vld [vmem:[%s401 + $0x8] sm:$0xff]
        %v404 = vld [vmem:[%s401 + $0x10] sm:$0xff]
        %v405 = vld [vmem:[%s401 + $0x18] sm:$0xff]
        %v406 = vmul.f32 %v402, %v376
        %v407 = vmul.f32 %v403, %v377
        %v408 = vmul.f32 %v404, %v378
        %v409 = vmul.f32 %v405, %v379
        %v410 = vrot.slane %v388, 1
        %v411 = vrot.slane %v389, 1
        %v412 = vrot.slane %v390, 1
        %v413 = vrot.slane %v391, 1
        %v414 = vlaneseq
        %v415 = vshrl.u32 %v414, 7
        %vm416 = vcmp.lt.s32.totalorder %v415, 7
        %v417 = vsel %vm416, %v412, %v413
        %v418 = vsel %vm416, %v411, %v412
        %v419 = vsel %vm416, %v410, %v411
        %v420 = vsel %vm416, %v413, %v410
        %v421 = vrot.slane %v397, 1
        %v422 = vrot.slane %v398, 1
        %v423 = vrot.slane %v399, 1
        %v424 = vrot.slane %v400, 1
        %v425 = vsel %vm416, %v423, %v424
        %v426 = vsel %vm416, %v422, %v423
        %v427 = vsel %vm416, %v421, %v422
        %v428 = vsel %vm416, %v424, %v421
        %v429 = vrot.slane %v406, 1
        %v430 = vrot.slane %v407, 1
        %v431 = vrot.slane %v408, 1
        %v432 = vrot.slane %v409, 1
        %v433 = vsel %vm416, %v431, %v432
        %v434 = vsel %vm416, %v430, %v431
        %v435 = vsel %vm416, %v429, %v430
        %v436 = vsel %vm416, %v432, %v429
        %437 = vrot.lane.b32.xlu0 %v388, 127
        %v438 = vpop.permute.xlu0 %437
        %439 = vrot.lane.b32.xlu0 %v389, 127
        %v440 = vpop.permute.xlu0 %439
        %441 = vrot.lane.b32.xlu0 %v390, 127
        %v442 = vpop.permute.xlu0 %441
        %443 = vrot.lane.b32.xlu0 %v391, 127
        %v444 = vpop.permute.xlu0 %443
        %v445 = vsel %vm374, %v438, 0.0
        %v446 = vsel %vm374, %v440, 0.0
        %v447 = vsel %vm374, %v442, 0.0
        %v448 = vsel %vm374, %v444, 0.0
        %v449 = vsub.f32 %v445, %v388
        %v450 = vsub.f32 %v446, %v389
        %v451 = vsub.f32 %v447, %v390
        %v452 = vsub.f32 %v448, %v391
        %453 = vrot.lane.b32.xlu0 %v397, 127
        %v454 = vpop.permute.xlu0 %453
        %455 = vrot.lane.b32.xlu0 %v398, 127
        %v456 = vpop.permute.xlu0 %455
        %457 = vrot.lane.b32.xlu0 %v399, 127
        %v458 = vpop.permute.xlu0 %457
        %459 = vrot.lane.b32.xlu0 %v400, 127
        %v460 = vpop.permute.xlu0 %459
        %v461 = vsel %vm374, %v454, 0.0
        %v462 = vsel %vm374, %v456, 0.0
        %v463 = vsel %vm374, %v458, 0.0
        %v464 = vsel %vm374, %v460, 0.0
        %v465 = vsub.f32 %v461, %v397
        %v466 = vsub.f32 %v462, %v398
        %v467 = vsub.f32 %v463, %v399
        %v468 = vsub.f32 %v464, %v400
        %469 = vrot.lane.b32.xlu0 %v406, 127
        %v470 = vpop.permute.xlu0 %469
        %471 = vrot.lane.b32.xlu0 %v407, 127
        %v472 = vpop.permute.xlu0 %471
        %473 = vrot.lane.b32.xlu0 %v408, 127
        %v474 = vpop.permute.xlu0 %473
        %475 = vrot.lane.b32.xlu0 %v409, 127
        %v476 = vpop.permute.xlu0 %475
        %v477 = vsel %vm374, %v470, 0.0
        %v478 = vsel %vm374, %v472, 0.0
        %v479 = vsel %vm374, %v474, 0.0
        %v480 = vsel %vm374, %v476, 0.0
        %v481 = vsub.f32 %v477, %v406
        %v482 = vsub.f32 %v478, %v407
        %v483 = vsub.f32 %v479, %v408
        %v484 = vsub.f32 %v480, %v409
        %v485 = vsub.f32 %v419, %v388
        %v486 = vsub.f32 %v418, %v389
        %v487 = vsub.f32 %v417, %v390
        %v488 = vsub.f32 %v420, %v391
        %v489 = vsub.f32 %v427, %v397
        %v490 = vsub.f32 %v426, %v398
        %v491 = vsub.f32 %v425, %v399
        %v492 = vsub.f32 %v428, %v400
        %v493 = vsub.f32 %v435, %v406
        %v494 = vsub.f32 %v434, %v407
        %v495 = vsub.f32 %v433, %v408
        %v496 = vsub.f32 %v436, %v409
        %v497 = vmul.f32 %v465, %v493
        %v498 = vmul.f32 %v466, %v494
        %v499 = vmul.f32 %v467, %v495
        %v500 = vmul.f32 %v468, %v496
        %v501 = vmul.f32 %v481, %v489
        %v502 = vmul.f32 %v482, %v490
        %v503 = vmul.f32 %v483, %v491
        %v504 = vmul.f32 %v484, %v492
        %v505 = vsub.f32 %v497, %v501
        %v506 = vsub.f32 %v498, %v502
        %v507 = vsub.f32 %v499, %v503
        %v508 = vsub.f32 %v500, %v504
        %v509 = vmul.f32 %v481, %v485
        %v510 = vmul.f32 %v482, %v486
        %v511 = vmul.f32 %v483, %v487
        %v512 = vmul.f32 %v484, %v488
        %v513 = vmul.f32 %v449, %v493
        %v514 = vmul.f32 %v450, %v494
        %v515 = vmul.f32 %v451, %v495
        %v516 = vmul.f32 %v452, %v496
        %v517 = vsub.f32 %v509, %v513
        %v518 = vsub.f32 %v510, %v514
        %v519 = vsub.f32 %v511, %v515
        %v520 = vsub.f32 %v512, %v516
        %v521 = vmul.f32 %v449, %v489
        %v522 = vmul.f32 %v450, %v490
        %v523 = vmul.f32 %v451, %v491
        %v524 = vmul.f32 %v452, %v492
        %v525 = vmul.f32 %v465, %v485
        %v526 = vmul.f32 %v466, %v486
        %v527 = vmul.f32 %v467, %v487
        %v528 = vmul.f32 %v468, %v488
        %v529 = vsub.f32 %v521, %v525
        %v530 = vsub.f32 %v522, %v526
        %v531 = vsub.f32 %v523, %v527
        %v532 = vsub.f32 %v524, %v528
        %v533 = vmul.f32 %v505, %v505
        %v534 = vmul.f32 %v506, %v506
        %v535 = vmul.f32 %v507, %v507
        %v536 = vmul.f32 %v508, %v508
        %v537 = vmul.f32 %v517, %v517
        %v538 = vmul.f32 %v518, %v518
        %v539 = vmul.f32 %v519, %v519
        %v540 = vmul.f32 %v520, %v520
        %v541 = vadd.f32 %v533, %v537
        %v542 = vadd.f32 %v534, %v538
        %v543 = vadd.f32 %v535, %v539
        %v544 = vadd.f32 %v536, %v540
        %v545 = vmul.f32 %v529, %v529
        %v546 = vmul.f32 %v530, %v530
        %v547 = vmul.f32 %v531, %v531
        %v548 = vmul.f32 %v532, %v532
        %v549 = vadd.f32 %v541, %v545
        %v550 = vadd.f32 %v542, %v546
        %v551 = vadd.f32 %v543, %v547
        %v552 = vadd.f32 %v544, %v548
        %v553 = vmax.f32 %v549, 1e-24
        %v554 = vmax.f32 %v550, 1e-24
        %v555 = vmax.f32 %v551, 1e-24
        %v556 = vmax.f32 %v552, 1e-24
        %v557 = vrsqrt.pop %v553
        %v558 = vrsqrt.pop %v554
        %v559 = vrsqrt.pop %v555
        %v560 = vrsqrt.pop %v556
        %v561 = vmul.f32 %v505, %v557
        %v562 = vmul.f32 %v506, %v558
        %v563 = vmul.f32 %v507, %v559
        %v564 = vmul.f32 %v508, %v560
        %v565 = vmul.f32 %v517, %v557
        %v566 = vmul.f32 %v518, %v558
        %v567 = vmul.f32 %v519, %v559
        %v568 = vmul.f32 %v520, %v560
        %v569 = vmul.f32 %v529, %v557
        %v570 = vmul.f32 %v530, %v558
        %v571 = vmul.f32 %v531, %v559
        %v572 = vmul.f32 %v532, %v560
        %v573 = vmul.f32 %v561, %v561
        %v574 = vmul.f32 %v562, %v562
        %v575 = vmul.f32 %v563, %v563
        %v576 = vmul.f32 %v564, %v564
        %v577 = vmul.f32 %v565, %v565
        %v578 = vmul.f32 %v566, %v566
        %v579 = vmul.f32 %v567, %v567
        %v580 = vmul.f32 %v568, %v568
        %v581 = vmul.f32 %v569, %v569
        %v582 = vmul.f32 %v570, %v570
        %v583 = vmul.f32 %v571, %v571
        %v584 = vmul.f32 %v572, %v572
        %v585 = vmul.f32 %v565, -0.121447206
        %v586 = vmul.f32 %v566, -0.121447206
        %v587 = vmul.f32 %v567, -0.121447206
        %v588 = vmul.f32 %v568, -0.121447206
        %v589 = vmul.f32 %v565, -1.348548
        %v590 = vmul.f32 %v566, -1.348548
        %v591 = vmul.f32 %v567, -1.348548
        %v592 = vmul.f32 %v568, -1.348548
        %v593 = vmul.f32 %v565, -0.69367766
        %v594 = vmul.f32 %v566, -0.69367766
        %v595 = vmul.f32 %v567, -0.69367766
        %v596 = vmul.f32 %v568, -0.69367766
        %v597 = vmul.f32 %v569, 0.79971975
        %v598 = vmul.f32 %v570, 0.79971975
        %v599 = vmul.f32 %v571, 0.79971975
        %v600 = vmul.f32 %v572, 0.79971975
        %v601 = vadd.f32 %v585, %v597
        %v602 = vadd.f32 %v586, %v598
        %v603 = vadd.f32 %v587, %v599
        %v604 = vadd.f32 %v588, %v600
        %v605 = vmul.f32 %v569, 1.6982158
        %v606 = vmul.f32 %v570, 1.6982158
        %v607 = vmul.f32 %v571, 1.6982158
        %v608 = vmul.f32 %v572, 1.6982158
        %v609 = vadd.f32 %v589, %v605
        %v610 = vadd.f32 %v590, %v606
        %v611 = vadd.f32 %v591, %v607
        %v612 = vadd.f32 %v592, %v608
        %v613 = vmul.f32 %v569, 0.42072576
        %v614 = vmul.f32 %v570, 0.42072576
        %v615 = vmul.f32 %v571, 0.42072576
        %v616 = vmul.f32 %v572, 0.42072576
        %v617 = vadd.f32 %v593, %v613
        %v618 = vadd.f32 %v594, %v614
        %v619 = vadd.f32 %v595, %v615
        %v620 = vadd.f32 %v596, %v616
        %v621 = vmul.f32 %v561, -0.2674089
        %v622 = vmul.f32 %v562, -0.2674089
        %v623 = vmul.f32 %v563, -0.2674089
        %v624 = vmul.f32 %v564, -0.2674089
        %v625 = vadd.f32 %v601, %v621
        %v626 = vadd.f32 %v602, %v622
        %v627 = vadd.f32 %v603, %v623
        %v628 = vadd.f32 %v604, %v624
        %v629 = vmul.f32 %v561, -0.6894747
        %v630 = vmul.f32 %v562, -0.6894747
        %v631 = vmul.f32 %v563, -0.6894747
        %v632 = vmul.f32 %v564, -0.6894747
        %v633 = vadd.f32 %v609, %v629
        %v634 = vadd.f32 %v610, %v630
        %v635 = vadd.f32 %v611, %v631
        %v636 = vadd.f32 %v612, %v632
        %v637 = vmul.f32 %v561, -1.3831555
        %v638 = vmul.f32 %v562, -1.3831555
        %v639 = vmul.f32 %v563, -1.3831555
        %v640 = vmul.f32 %v564, -1.3831555
        %v641 = vadd.f32 %v617, %v637
        %v642 = vadd.f32 %v618, %v638
        %v643 = vadd.f32 %v619, %v639
        %v644 = vadd.f32 %v620, %v640
        %v645 = vmul.f32 %v561, %v565
        %v646 = vmul.f32 %v562, %v566
        %v647 = vmul.f32 %v563, %v567
        %v648 = vmul.f32 %v564, %v568
        %v649 = vmul.f32 %v645, 0.7428611
        %v650 = vmul.f32 %v646, 0.7428611
        %v651 = vmul.f32 %v647, 0.7428611
        %v652 = vmul.f32 %v648, 0.7428611
        %v653 = vadd.f32 %v625, %v649
        %v654 = vadd.f32 %v626, %v650
        %v655 = vadd.f32 %v627, %v651
        %v656 = vadd.f32 %v628, %v652
        %v657 = vmul.f32 %v645, -0.44281256
        %v658 = vmul.f32 %v646, -0.44281256
        %v659 = vmul.f32 %v647, -0.44281256
        %v660 = vmul.f32 %v648, -0.44281256
        %v661 = vadd.f32 %v633, %v657
        %v662 = vadd.f32 %v634, %v658
        %v663 = vadd.f32 %v635, %v659
        %v664 = vadd.f32 %v636, %v660
        %v665 = vmul.f32 %v645, -0.9308274
        %v666 = vmul.f32 %v646, -0.9308274
        %v667 = vmul.f32 %v647, -0.9308274
        %v668 = vmul.f32 %v648, -0.9308274
        %v669 = vadd.f32 %v641, %v665
        %v670 = vadd.f32 %v642, %v666
        %v671 = vadd.f32 %v643, %v667
        %v672 = vadd.f32 %v644, %v668
        %v673 = vmul.f32 %v565, %v569
        %v674 = vmul.f32 %v566, %v570
        %v675 = vmul.f32 %v567, %v571
        %v676 = vmul.f32 %v568, %v572
        %v677 = vmul.f32 %v673, 1.3642888
        %v678 = vmul.f32 %v674, 1.3642888
        %v679 = vmul.f32 %v675, 1.3642888
        %v680 = vmul.f32 %v676, 1.3642888
        %v681 = vadd.f32 %v653, %v677
        %v682 = vadd.f32 %v654, %v678
        %v683 = vadd.f32 %v655, %v679
        %v684 = vadd.f32 %v656, %v680
        %v685 = vmul.f32 %v673, 1.169158
        %v686 = vmul.f32 %v674, 1.169158
        %v687 = vmul.f32 %v675, 1.169158
        %v688 = vmul.f32 %v676, 1.169158
        %v689 = vadd.f32 %v661, %v685
        %v690 = vadd.f32 %v662, %v686
        %v691 = vadd.f32 %v663, %v687
        %v692 = vadd.f32 %v664, %v688
        %v693 = vmul.f32 %v673, 0.2968385
        %v694 = vmul.f32 %v674, 0.2968385
        %v695 = vmul.f32 %v675, 0.2968385
        %v696 = vmul.f32 %v676, 0.2968385
        %v697 = vadd.f32 %v669, %v693
        %v698 = vadd.f32 %v670, %v694
        %v699 = vadd.f32 %v671, %v695
        %v700 = vadd.f32 %v672, %v696
        %v701 = vmul.f32 %v581, 2.0
        %v702 = vmul.f32 %v582, 2.0
        %v703 = vmul.f32 %v583, 2.0
        %v704 = vmul.f32 %v584, 2.0
        %v705 = vsub.f32 %v701, %v573
        %v706 = vsub.f32 %v702, %v574
        %v707 = vsub.f32 %v703, %v575
        %v708 = vsub.f32 %v704, %v576
        %v709 = vsub.f32 %v705, %v577
        %v710 = vsub.f32 %v706, %v578
        %v711 = vsub.f32 %v707, %v579
        %v712 = vsub.f32 %v708, %v580
        %v713 = vmul.f32 %v709, 0.29334566
        %v714 = vmul.f32 %v710, 0.29334566
        %v715 = vmul.f32 %v711, 0.29334566
        %v716 = vmul.f32 %v712, 0.29334566
        %v717 = vadd.f32 %v681, %v713
        %v718 = vadd.f32 %v682, %v714
        %v719 = vadd.f32 %v683, %v715
        %v720 = vadd.f32 %v684, %v716
        %v721 = vmul.f32 %v709, 0.57359713
        %v722 = vmul.f32 %v710, 0.57359713
        %v723 = vmul.f32 %v711, 0.57359713
        %v724 = vmul.f32 %v712, 0.57359713
        %v725 = vadd.f32 %v689, %v721
        %v726 = vadd.f32 %v690, %v722
        %v727 = vadd.f32 %v691, %v723
        %v728 = vadd.f32 %v692, %v724
        %v729 = vmul.f32 %v709, -2.1755843
        %v730 = vmul.f32 %v710, -2.1755843
        %v731 = vmul.f32 %v711, -2.1755843
        %v732 = vmul.f32 %v712, -2.1755843
        %v733 = vadd.f32 %v697, %v729
        %v734 = vadd.f32 %v698, %v730
        %v735 = vadd.f32 %v699, %v731
        %v736 = vadd.f32 %v700, %v732
        %v737 = vmul.f32 %v569, %v561
        %v738 = vmul.f32 %v570, %v562
        %v739 = vmul.f32 %v571, %v563
        %v740 = vmul.f32 %v572, %v564
        %v741 = vmul.f32 %v737, 0.012489004
        %v742 = vmul.f32 %v738, 0.012489004
        %v743 = vmul.f32 %v739, 0.012489004
        %v744 = vmul.f32 %v740, 0.012489004
        %v745 = vadd.f32 %v717, %v741
        %v746 = vadd.f32 %v718, %v742
        %v747 = vadd.f32 %v719, %v743
        %v748 = vadd.f32 %v720, %v744
        %v749 = vmul.f32 %v737, -0.88396823
        %v750 = vmul.f32 %v738, -0.88396823
        %v751 = vmul.f32 %v739, -0.88396823
        %v752 = vmul.f32 %v740, -0.88396823
        %v753 = vadd.f32 %v725, %v749
        %v754 = vadd.f32 %v726, %v750
        %v755 = vadd.f32 %v727, %v751
        %v756 = vadd.f32 %v728, %v752
        %v757 = vmul.f32 %v737, 0.9614431
        %v758 = vmul.f32 %v738, 0.9614431
        %v759 = vmul.f32 %v739, 0.9614431
        %v760 = vmul.f32 %v740, 0.9614431
        %v761 = vadd.f32 %v733, %v757
        %v762 = vadd.f32 %v734, %v758
        %v763 = vadd.f32 %v735, %v759
        %v764 = vadd.f32 %v736, %v760
        %v765 = vsub.f32 %v573, %v577
        %v766 = vsub.f32 %v574, %v578
        %v767 = vsub.f32 %v575, %v579
        %v768 = vsub.f32 %v576, %v580
        %v769 = vmul.f32 %v765, 1.075184
        %v770 = vmul.f32 %v766, 1.075184
        %v771 = vmul.f32 %v767, 1.075184
        %v772 = vmul.f32 %v768, 1.075184
        %v773 = vadd.f32 %v745, %v769
        %v774 = vadd.f32 %v746, %v770
        %v775 = vadd.f32 %v747, %v771
        %v776 = vadd.f32 %v748, %v772
        %v777 = vmul.f32 %v765, -0.09971039
        %v778 = vmul.f32 %v766, -0.09971039
        %v779 = vmul.f32 %v767, -0.09971039
        %v780 = vmul.f32 %v768, -0.09971039
        %v781 = vadd.f32 %v753, %v777
        %v782 = vadd.f32 %v754, %v778
        %v783 = vadd.f32 %v755, %v779
        %v784 = vadd.f32 %v756, %v780
        %v785 = vmul.f32 %v765, -1.6709231
        %v786 = vmul.f32 %v766, -1.6709231
        %v787 = vmul.f32 %v767, -1.6709231
        %v788 = vmul.f32 %v768, -1.6709231
        %v789 = vadd.f32 %v761, %v785
        %v790 = vadd.f32 %v762, %v786
        %v791 = vadd.f32 %v763, %v787
        %v792 = vadd.f32 %v764, %v788
        %v793 = vadd.f32 %v773, -1.0208853
        %v794 = vadd.f32 %v774, -1.0208853
        %v795 = vadd.f32 %v775, -1.0208853
        %v796 = vadd.f32 %v776, -1.0208853
        %v797 = vadd.f32 %v781, 0.60980767
        %v798 = vadd.f32 %v782, 0.60980767
        %v799 = vadd.f32 %v783, 0.60980767
        %v800 = vadd.f32 %v784, 0.60980767
        %v801 = vadd.f32 %v789, -1.2941693
        %v802 = vadd.f32 %v790, -1.2941693
        %v803 = vadd.f32 %v791, -1.2941693
        %v804 = vadd.f32 %v792, -1.2941693
        %v805 = vmul.f32 %v793, %v380
        %v806 = vmul.f32 %v794, %v381
        %v807 = vmul.f32 %v795, %v382
        %v808 = vmul.f32 %v796, %v383
        %v809 = vrot.slane %v806, 1
        %v810 = vrot.slane %v807, 1
        %v811 = vrot.slane %v808, 1
        %v812 = vsel %vm416, %v810, %v811
        %v813 = vsel %vm416, %v809, %v810
        %v814 = vadd.f32 %v806, %v813
        %v815 = vadd.f32 %v807, %v812
        %v816 = vrot.slane %v805, 7
        %v817 = vrot.slane %v806, 7
        %v818 = vrot.slane %v807, 7
        %vm819 = vcmp.lt.s32.totalorder %v415, 1
        %v820 = vsel %vm819, %v817, %v818
        %v821 = vsel %vm819, %v816, %v817
        %v822 = vadd.f32 %v814, %v821
        %v823 = vadd.f32 %v815, %v820
        %824 = vrot.lane.b32.xlu0 %v822, 127
        %v825 = vpop.permute.xlu0 %824
        %826 = vrot.lane.b32.xlu0 %v823, 127
        %v827 = vpop.permute.xlu0 %826
        %v828 = vsel %vm374, %v825, 0.0
        %v829 = vsel %vm374, %v827, 0.0
        %v830 = vadd.f32 %v822, %v828
        %v831 = vadd.f32 %v823, %v829
        %832 = vrot.lane.b32.xlu0 %v822, 1
        %v833 = vpop.permute.xlu0 %832
        %834 = vrot.lane.b32.xlu0 %v823, 1
        %v835 = vpop.permute.xlu0 %834
        %v836 = vsel %vm375, %v833, 0.0
        %v837 = vsel %vm375, %v835, 0.0
        %v838 = vadd.f32 %v830, %v836
        %v839 = vadd.f32 %v831, %v837
        %v840 = vmul.f32 %v838, 0.11111111
        %v841 = vmul.f32 %v839, 0.11111111
        %v842 = vsub.f32 %v806, %v840
        %v843 = vsub.f32 %v807, %v841
        %v844 = vld [vmem:[%s303] sm:$0xff]
        %v845 = vld [vmem:[%s303 + $0x8] sm:$0xff]
        %v846 = vsub.f32 %v842, %v844
        %v847 = vsub.f32 %v843, %v845
        %v848 = vmul.f32 %v846, %v846
        %v849 = vmul.f32 %v847, %v847
        %v850 = vadd.f32 %v848, 0.0
        %v851 = vadd.f32 %v849, 0.0
        %v852 = vadd.f32 %v389, %v418
        %v853 = vadd.f32 %v390, %v417
        %v854 = vrot.slane %v388, 7
        %v855 = vrot.slane %v389, 7
        %v856 = vrot.slane %v390, 7
        %v857 = vsel %vm819, %v855, %v856
        %v858 = vsel %vm819, %v854, %v855
        %v859 = vadd.f32 %v852, %v858
        %v860 = vadd.f32 %v853, %v857
        %861 = vrot.lane.b32.xlu0 %v859, 127
        %v862 = vpop.permute.xlu0 %861
        %863 = vrot.lane.b32.xlu0 %v860, 127
        %v864 = vpop.permute.xlu0 %863
        %v865 = vsel %vm374, %v862, 0.0
        %v866 = vsel %vm374, %v864, 0.0
        %v867 = vadd.f32 %v859, %v865
        %v868 = vadd.f32 %v860, %v866
        %869 = vrot.lane.b32.xlu0 %v859, 1
        %v870 = vpop.permute.xlu0 %869
        %871 = vrot.lane.b32.xlu0 %v860, 1
        %v872 = vpop.permute.xlu0 %871
        %v873 = vsel %vm375, %v870, 0.0
        %v874 = vsel %vm375, %v872, 0.0
        %v875 = vadd.f32 %v867, %v873
        %v876 = vadd.f32 %v868, %v874
        %v877 = vmul.f32 %v875, 0.11111111
        %v878 = vmul.f32 %v876, 0.11111111
        %v879 = vsub.f32 %v389, %v877
        %v880 = vsub.f32 %v390, %v878
        %v881 = vmul.f32 %v879, %v879
        %v882 = vmul.f32 %v880, %v880
        %v883 = vadd.f32 %v881, 0.0
        %v884 = vadd.f32 %v882, 0.0
        %v885 = vmul.f32 %v797, %v380
        %v886 = vmul.f32 %v798, %v381
        %v887 = vmul.f32 %v799, %v382
        %v888 = vmul.f32 %v800, %v383
        %v889 = vrot.slane %v886, 1
        %v890 = vrot.slane %v887, 1
        %v891 = vrot.slane %v888, 1
        %v892 = vsel %vm416, %v890, %v891
        %v893 = vsel %vm416, %v889, %v890
        %v894 = vadd.f32 %v886, %v893
        %v895 = vadd.f32 %v887, %v892
        %v896 = vrot.slane %v885, 7
        %v897 = vrot.slane %v886, 7
        %v898 = vrot.slane %v887, 7
        %v899 = vsel %vm819, %v897, %v898
        %v900 = vsel %vm819, %v896, %v897
        %v901 = vadd.f32 %v894, %v900
        %v902 = vadd.f32 %v895, %v899
        %903 = vrot.lane.b32.xlu0 %v901, 127
        %v904 = vpop.permute.xlu0 %903
        %905 = vrot.lane.b32.xlu0 %v902, 127
        %v906 = vpop.permute.xlu0 %905
        %v907 = vsel %vm374, %v904, 0.0
        %v908 = vsel %vm374, %v906, 0.0
        %v909 = vadd.f32 %v901, %v907
        %v910 = vadd.f32 %v902, %v908
        %911 = vrot.lane.b32.xlu0 %v901, 1
        %v912 = vpop.permute.xlu0 %911
        %913 = vrot.lane.b32.xlu0 %v902, 1
        %v914 = vpop.permute.xlu0 %913
        %v915 = vsel %vm375, %v912, 0.0
        %v916 = vsel %vm375, %v914, 0.0
        %v917 = vadd.f32 %v909, %v915
        %v918 = vadd.f32 %v910, %v916
        %v919 = vmul.f32 %v917, 0.11111111
        %v920 = vmul.f32 %v918, 0.11111111
        %v921 = vsub.f32 %v886, %v919
        %v922 = vsub.f32 %v887, %v920
        %s923 = scalar_lea.vmem %s303, 16 [#allocation4]
        %v924 = vld [vmem:[%s923] sm:$0xff]
        %v925 = vld [vmem:[%s923 + $0x8] sm:$0xff]
        %v926 = vsub.f32 %v921, %v924
        %v927 = vsub.f32 %v922, %v925
        %v928 = vmul.f32 %v926, %v926
        %v929 = vmul.f32 %v927, %v927
        %v930 = vadd.f32 %v850, %v928
        %v931 = vadd.f32 %v851, %v929
        %v932 = vadd.f32 %v398, %v426
        %v933 = vadd.f32 %v399, %v425
        %v934 = vrot.slane %v397, 7
        %v935 = vrot.slane %v398, 7
        %v936 = vrot.slane %v399, 7
        %v937 = vsel %vm819, %v935, %v936
        %v938 = vsel %vm819, %v934, %v935
        %v939 = vadd.f32 %v932, %v938
        %v940 = vadd.f32 %v933, %v937
        %941 = vrot.lane.b32.xlu0 %v939, 127
        %v942 = vpop.permute.xlu0 %941
        %943 = vrot.lane.b32.xlu0 %v940, 127
        %v944 = vpop.permute.xlu0 %943
        %v945 = vsel %vm374, %v942, 0.0
        %v946 = vsel %vm374, %v944, 0.0
        %v947 = vadd.f32 %v939, %v945
        %v948 = vadd.f32 %v940, %v946
        %949 = vrot.lane.b32.xlu0 %v939, 1
        %v950 = vpop.permute.xlu0 %949
        %951 = vrot.lane.b32.xlu0 %v940, 1
        %v952 = vpop.permute.xlu0 %951
        %v953 = vsel %vm375, %v950, 0.0
        %v954 = vsel %vm375, %v952, 0.0
        %v955 = vadd.f32 %v947, %v953
        %v956 = vadd.f32 %v948, %v954
        %v957 = vmul.f32 %v955, 0.11111111
        %v958 = vmul.f32 %v956, 0.11111111
        %v959 = vsub.f32 %v398, %v957
        %v960 = vsub.f32 %v399, %v958
        %v961 = vmul.f32 %v959, %v959
        %v962 = vmul.f32 %v960, %v960
        %v963 = vadd.f32 %v883, %v961
        %v964 = vadd.f32 %v884, %v962
        %v965 = vmul.f32 %v801, %v380
        %v966 = vmul.f32 %v802, %v381
        %v967 = vmul.f32 %v803, %v382
        %v968 = vmul.f32 %v804, %v383
        %v969 = vrot.slane %v966, 1
        %v970 = vrot.slane %v967, 1
        %v971 = vrot.slane %v968, 1
        %v972 = vsel %vm416, %v970, %v971
        %v973 = vsel %vm416, %v969, %v970
        %v974 = vadd.f32 %v966, %v973
        %v975 = vadd.f32 %v967, %v972
        %v976 = vrot.slane %v965, 7
        %v977 = vrot.slane %v966, 7
        %v978 = vrot.slane %v967, 7
        %v979 = vsel %vm819, %v977, %v978
        %v980 = vsel %vm819, %v976, %v977
        %v981 = vadd.f32 %v974, %v980
        %v982 = vadd.f32 %v975, %v979
        %983 = vrot.lane.b32.xlu0 %v981, 127
        %v984 = vpop.permute.xlu0 %983
        %985 = vrot.lane.b32.xlu0 %v982, 127
        %v986 = vpop.permute.xlu0 %985
        %v987 = vsel %vm374, %v984, 0.0
        %v988 = vsel %vm374, %v986, 0.0
        %v989 = vadd.f32 %v981, %v987
        %v990 = vadd.f32 %v982, %v988
        %991 = vrot.lane.b32.xlu0 %v981, 1
        %v992 = vpop.permute.xlu0 %991
        %993 = vrot.lane.b32.xlu0 %v982, 1
        %v994 = vpop.permute.xlu0 %993
        %v995 = vsel %vm375, %v992, 0.0
        %v996 = vsel %vm375, %v994, 0.0
        %v997 = vadd.f32 %v989, %v995
        %v998 = vadd.f32 %v990, %v996
        %v999 = vmul.f32 %v997, 0.11111111
        %v1000 = vmul.f32 %v998, 0.11111111
        %v1001 = vsub.f32 %v966, %v999
        %v1002 = vsub.f32 %v967, %v1000
        %s1003 = scalar_lea.vmem %s303, 32 [#allocation4]
        %v1004 = vld [vmem:[%s1003] sm:$0xff]
        %v1005 = vld [vmem:[%s1003 + $0x8] sm:$0xff]
        %v1006 = vsub.f32 %v1001, %v1004
        %v1007 = vsub.f32 %v1002, %v1005
        %v1008 = vmul.f32 %v1006, %v1006
        %v1009 = vmul.f32 %v1007, %v1007
        %v1010 = vadd.f32 %v930, %v1008
        %v1011 = vadd.f32 %v931, %v1009
        %v1012 = vadd.f32 %v407, %v434
        %v1013 = vadd.f32 %v408, %v433
        %v1014 = vrot.slane %v406, 7
        %v1015 = vrot.slane %v407, 7
        %v1016 = vrot.slane %v408, 7
        %v1017 = vsel %vm819, %v1015, %v1016
        %v1018 = vsel %vm819, %v1014, %v1015
        %v1019 = vadd.f32 %v1012, %v1018
        %v1020 = vadd.f32 %v1013, %v1017
        %1021 = vrot.lane.b32.xlu0 %v1019, 127
        %v1022 = vpop.permute.xlu0 %1021
        %1023 = vrot.lane.b32.xlu0 %v1020, 127
        %v1024 = vpop.permute.xlu0 %1023
        %v1025 = vsel %vm374, %v1022, 0.0
        %v1026 = vsel %vm374, %v1024, 0.0
        %v1027 = vadd.f32 %v1019, %v1025
        %v1028 = vadd.f32 %v1020, %v1026
        %1029 = vrot.lane.b32.xlu0 %v1019, 1
        %v1030 = vpop.permute.xlu0 %1029
        %1031 = vrot.lane.b32.xlu0 %v1020, 1
        %v1032 = vpop.permute.xlu0 %1031
        %v1033 = vsel %vm375, %v1030, 0.0
        %v1034 = vsel %vm375, %v1032, 0.0
        %v1035 = vadd.f32 %v1027, %v1033
        %v1036 = vadd.f32 %v1028, %v1034
        %v1037 = vmul.f32 %v1035, 0.11111111
        %v1038 = vmul.f32 %v1036, 0.11111111
        %v1039 = vsub.f32 %v407, %v1037
        %v1040 = vsub.f32 %v408, %v1038
        %v1041 = vmul.f32 %v1039, %v1039
        %v1042 = vmul.f32 %v1040, %v1040
        %v1043 = vadd.f32 %v963, %v1041
        %v1044 = vadd.f32 %v964, %v1042
        %v1045 = vld [vmem:[%s294] sm:$0xff]
        %v1046 = vld [vmem:[%s294 + $0x8] sm:$0xff]
        %v1047 = vsub.f32 %v377, %v1045
        %v1048 = vsub.f32 %v378, %v1046
        %v1049 = vmul.f32 %v381, %v1010
        %v1050 = vmul.f32 %v382, %v1011
        %v1051 = vadd.f32 %v1049, %v1050
        %1052 = vst [vmem:[%s371] sm:$0xff] %v1051
        %v1053 = vmul.f32 %v381, %v1043
        %v1054 = vmul.f32 %v382, %v1044
        %v1055 = vadd.f32 %v1053, %v1054
        %s1056 = scalar_lea.vmem %s371, 8
        %1057 = vst [vmem:[%s1056] sm:$0xff] %v1055
        %v1058 = vmul.f32 %v1047, %v1047
        %v1059 = vmul.f32 %v1048, %v1048
        %v1060 = vadd.f32 %v1058, %v1059
        %s1061 = scalar_lea.vmem %s371, 16
        %1062 = vst [vmem:[%s1061] sm:$0xff] %v1060
        %p1063 = scmp.lt.s32.totalorder %s22, 1
        %s1064 = scalar_select %p1063, %s22, 1
        %s1065 = smul.addr %s1064, 3
        %s1066 = smul.addr %s1065, 8
        %s1067 = scalar_lea.vmem %s5, %s1066
        // Predicated region
        $region49: #{loss_all.1} parent=39 // pred_check
          %p1068 = pneg %p170
        $region50: #{loss_all.1} parent=39 // pred_check_branch
          %1070 = sbr.rel (%p1068) target = $region52
        $region51: #{loss_all.1} parent=39 // pred_region
          _
        $region52: #{loss_all.1} parent=39 // pred_fallthru
          _
      $region40: #{loss_all.1} parent=5 // pred_fallthru
        _
      %p1071 = scmp.le.s32.totalorder 2, %s17
      // Predicated region
      $region53: #{loss_all.1} parent=5 // pred_check
        %p1072 = pneg %p1071
      $region54: #{loss_all.1} parent=5 // pred_check_branch
        %1074 = sbr.rel (%p1072) target = $region56
      $region55: #{loss_all.1} parent=5 // pred_region
        %s1075 = ssub.s32 %s17, 2
        // Predicated region
        $region57: #{loss_all.1} parent=55 // pred_check
          %p1076 = pneg %p176
        $region58: #{loss_all.1} parent=55 // pred_check_branch
          %1078 = sbr.rel (%p1076) target = $region60
        $region59: #{loss_all.1} parent=55 // pred_region
          %p1079 = scmp.lt.s32.totalorder %s23, 1
          %s1080 = scalar_select %p1079, %s23, 1
          %s1081 = smul.addr %s1080, 3
          %s1082 = smul.addr %s1081, 8
          %s1083 = scalar_lea.vmem %s5, %s1082
        $region60: #{loss_all.1} parent=55 // pred_fallthru
          _
      $region56: #{loss_all.1} parent=5 // pred_fallthru
        _
    $region6: #{loss_all.1} parent=1 // loop_footer
      %s21 = sadd.s32 1, %s17
    $region7: #{loss_all.1} parent=1 // loop_footer_branch
      %16 = sbr.rel target = $region3
    $region8: #{loss_all.1} parent=1 // loop_exit
      _
    %1084 = vsyncpa [#allocation3], 1
    %s1085 = scalar_lea.sflag [#allocation3], 1
    %1086 = vsyncpa %s1085, 1
    %1087 = vsyncpa [#allocation5], 1
    %s1088 = scalar_lea.sflag [#allocation5], 1
    %1089 = vsyncpa %s1088, 1

</llo_original>
